<compile_context>
chip_gen: v7x
topology: tpu7x:2x2x1
jax: 0.10.0
libtpu: 0.0.40
codegen_flags: <defaults>
</compile_context>

<pallas_src>
import math
import functools

import jax
import jax.numpy as jnp
from jax.experimental import pallas as pl
from jax.experimental.pallas import tpu as pltpu

HIDDEN = 32          # args.hidden_size
FFN = 32             # dim_feedforward hard-coded to 32
HEADS = 4            # args.attn_heads
HEAD_DIM = HIDDEN // HEADS
LAYERS = 2           # args.transformer_layers
VOCAB = 50           # vocab_size
VOCAB_PAD = 64       # pad embedding rows to a multiple of 8 (ids never hit pad rows)
MAX_LEN = 16         # args.max_len
EMB_ROWS = VOCAB_PAD + MAX_LEN   # stacked tok+pos table rows (80, sublane aligned)
LN_EPS = 1e-5
OUT_CLASSES = 2
OUT_PAD = 128        # lane-padded head output; wrapper slices [:, :2]


def transformer_kernel(ids_ref, pid_ref, emb_ref, blk_ref, perm_ref,
                       w_in_ref, b_in_ref, wo_ref, bo_ref,
                       g1_ref, be1_ref, w1_ref, b1_ref, w2_ref, b2_ref,
                       g2_ref, be2_ref, wh_ref, bh_ref, out_ref,
                       *, seq, batch, layers):
    sb = seq * batch

    # --- fused token + positional embedding: ONE one-hot matmul against the
    #     stacked table (pid already offset by VOCAB_PAD in the wrapper) ---
    col = jax.lax.broadcasted_iota(jnp.int32, (sb, EMB_ROWS), 1)
    onehot = ((col == ids_ref[...]) | (col == pid_ref[...])).astype(jnp.float32)
    x = jnp.dot(onehot, emb_ref[...], preferred_element_type=jnp.float32)   # [S*B, H]
    # TODO(synk): nn.Dropout(p=0.1) built inside forward() is identity here
    # (inference semantics); training-mode PyTorch outputs will differ.

    def layer_norm(y, g, b):
        mu = jnp.mean(y, axis=-1, keepdims=True)
        var = jnp.mean((y - mu) ** 2, axis=-1, keepdims=True)
        return (y - mu) * jax.lax.rsqrt(var + LN_EPS) * g + b

    blk = blk_ref[...]                      # [H, H] block-diag head-segment ones

    for l in range(layers):
        # ---- fused QKV projection: one lane-dense [H,3H] matmul + one bias add
        #      (1/sqrt(head_dim) is pre-folded into the Q block of W_in / b_in) ----
        qkv = jnp.dot(x, w_in_ref[l], preferred_element_type=jnp.float32) + b_in_ref[l]
        q = qkv[:, 0 * HIDDEN:1 * HIDDEN]
        k = qkv[:, 1 * HIDDEN:2 * HIDDEN]
        v = qkv[:, 2 * HIDDEN:3 * HIDDEN]

        # ---- multi-head self-attention over the length-`batch` axis ----
        # Key/value rows at offset o within each group of `batch` rows come from a
        # tiny permutation matmul; (q*k) @ blk gives every head's score already
        # broadcast across its 8 lanes, so softmax and the weighted value sum are
        # plain full-width elementwise ops (no 3-D einsums, no head reshapes).
        ks = [k]
        vs = [v]
        for o in range(1, batch):
            ks.append(jnp.dot(perm_ref[o - 1], k, preferred_element_type=jnp.float32))
            vs.append(jnp.dot(perm_ref[o - 1], v, preferred_element_type=jnp.float32))
        ss = [jnp.dot(q * kk, blk, preferred_element_type=jnp.float32) for kk in ks]

        m = ss[0]
        for s_o in ss[1:]:
            m = jnp.maximum(m, s_o)
        es = [jnp.exp(s_o - m) for s_o in ss]
        denom = es[0]
        for e in es[1:]:
            denom = denom + e
        # ~2^-12 relative deviation from exact division; acceptable tolerance here.
        inv = pl.reciprocal(denom, approx=True)
        ctx = es[0] * vs[0]
        for e, vv in zip(es[1:], vs[1:]):
            ctx = ctx + e * vv
        ctx = ctx * inv                                                     # [S*B, H]

        attn = jnp.dot(ctx, wo_ref[l], preferred_element_type=jnp.float32) + bo_ref[l]
        y = layer_norm(x + attn, g1_ref[l], be1_ref[l])                     # [S*B, H]

        # ---- feed-forward (H->FFN, ReLU, FFN->H), residual + LayerNorm ----
        h1 = jnp.maximum(
            jnp.dot(y, w1_ref[l], preferred_element_type=jnp.float32) + b1_ref[l], 0.0)
        h2 = jnp.dot(h1, w2_ref[l], preferred_element_type=jnp.float32) + b2_ref[l]
        x = layer_norm(y + h2, g2_ref[l], be2_ref[l])

    # ---- classifier head on x[:, 0] == rows (s=0, b=0..B-1) == first `batch` rows ----
    pooled = x[0:batch, :]                                                  # [B, H]
    out_ref[...] = (jnp.dot(pooled, wh_ref[...], preferred_element_type=jnp.float32)
                    + bh_ref[...])                                          # [B, OUT_PAD]


def _vmem_spec():
    return pl.BlockSpec(memory_space=pltpu.MemorySpace.VMEM)


@jax.jit
def transformer_forward(inputs, positions, params):
    B, S = inputs.shape
    sb = S * B
    # ids/positions in [S, B] order (attention runs over the B axis), flattened so
    # the kernel needs no transposes; positions offset into the stacked table.
    ids = inputs.T.reshape(sb, 1).astype(jnp.int32)
    pid = positions.T.reshape(sb, 1).astype(jnp.int32) + VOCAB_PAD

    # Tiny structural constants (constant-folded under jit, resident in VMEM).
    blk = jnp.kron(jnp.eye(HEADS, dtype=jnp.float32),
                   jnp.ones((HEAD_DIM, HEAD_DIM), jnp.float32))             # [H, H]
    row = jnp.arange(sb, dtype=jnp.int32)
    colv = jnp.arange(sb, dtype=jnp.int32)
    perms = []
    for o in range(1, B):
        partner = (row // B) * B + (row % B + o) % B
        perms.append((colv[None, :] == partner[:, None]).astype(jnp.float32))
    perm = jnp.stack(perms)                                                 # [B-1, sb, sb]

    args = (ids, pid, params['emb'], blk, perm,
            params['w_in'], params['b_in'], params['wo'], params['bo'],
            params['g1'], params['be1'], params['w1'], params['b1'],
            params['w2'], params['b2'], params['g2'], params['be2'],
            params['w_head'], params['b_head'])

    out = pl.pallas_call(
        functools.partial(transformer_kernel, seq=S, batch=B, layers=LAYERS),
        out_shape=jax.ShapeDtypeStruct((B, OUT_PAD), jnp.float32),
        in_specs=[_vmem_spec() for _ in args],
        out_specs=_vmem_spec(),
    )(*args)
    return out[:, :OUT_CLASSES]                                             # [B, 2]


def init_params(key):
    keys = jax.random.split(key, 3 + LAYERS)
    tok = jax.random.normal(keys[0], (VOCAB, HIDDEN), jnp.float32)
    tok = tok.at[0].set(0.0)                                   # padding_idx=0 row
    tok = jnp.pad(tok, ((0, VOCAB_PAD - VOCAB), (0, 0)))       # sublane-aligned table
    pos = jax.random.normal(keys[1], (MAX_LEN, HIDDEN), jnp.float32)
    emb = jnp.concatenate([tok, pos], axis=0)                  # stacked [80, H] table

    def uni(k, shape, fan_in):
        bound = 1.0 / math.sqrt(fan_in)
        return jax.random.uniform(k, shape, jnp.float32, -bound, bound)

    scale = 1.0 / math.sqrt(HEAD_DIM)

    acc = {k: [] for k in ('w_in', 'b_in', 'wo', 'bo', 'g1', 'be1',
                           'w1', 'b1', 'w2', 'b2', 'g2', 'be2')}
    for l in range(LAYERS):
        lk = jax.random.split(keys[2 + l], 6)
        w_in = uni(lk[0], (3 * HIDDEN, HIDDEN), HIDDEN).T      # PyTorch [3H,H] -> [H,3H]
        w_in = w_in.at[:, :HIDDEN].multiply(scale)             # fold 1/sqrt(hd) into Q block
        b_in = jnp.zeros((1, 3 * HIDDEN), jnp.float32)         # in_proj_bias = 0
        b_in = b_in.at[:, :HIDDEN].multiply(scale)             # keep Q-bias scaling consistent
        acc['w_in'].append(w_in)
        acc['b_in'].append(b_in)
        acc['wo'].append(uni(lk[1], (HIDDEN, HIDDEN), HIDDEN).T)   # out_proj.weight^T
        acc['bo'].append(jnp.zeros((1, HIDDEN), jnp.float32))      # out_proj.bias = 0
        acc['g1'].append(jnp.ones((1, HIDDEN), jnp.float32))
        acc['be1'].append(jnp.zeros((1, HIDDEN), jnp.float32))
        acc['w1'].append(uni(lk[2], (FFN, HIDDEN), HIDDEN).T)      # [H, FFN]
        acc['b1'].append(uni(lk[3], (1, FFN), HIDDEN))
        acc['w2'].append(uni(lk[4], (HIDDEN, FFN), FFN).T)         # [FFN, H]
        acc['b2'].append(uni(lk[5], (1, HIDDEN), FFN))
        acc['g2'].append(jnp.ones((1, HIDDEN), jnp.float32))
        acc['be2'].append(jnp.zeros((1, HIDDEN), jnp.float32))

    hk = jax.random.split(keys[2 + LAYERS], 2)
    w_head = uni(hk[0], (OUT_CLASSES, HIDDEN), HIDDEN)          # PyTorch [2, H]
    b_head = uni(hk[1], (OUT_CLASSES,), HIDDEN)
    wh = jnp.zeros((HIDDEN, OUT_PAD), jnp.float32).at[:, :OUT_CLASSES].set(w_head.T)
    bh = jnp.zeros((1, OUT_PAD), jnp.float32).at[:, :OUT_CLASSES].set(b_head)

    params = {k: jnp.stack(v) for k, v in acc.items()}          # leading [LAYERS] axis
    params.update(emb=emb, w_head=wh, b_head=bh)
    return params


if __name__ == "__main__":
    key = jax.random.PRNGKey(0)
    pkey, ikey = jax.random.split(key)
    params = init_params(pkey)

    B, S = 2, 8
    inputs = jax.random.randint(ikey, (B, S), 0, VOCAB, dtype=jnp.int32)
    positions = jnp.broadcast_to(jnp.arange(S, dtype=jnp.int32), (B, S))

    logits = transformer_forward(inputs, positions, params)
    logits = jax.block_until_ready(logits)
    assert logits.shape == (B, 2) and logits.dtype == jnp.float32
    print("KERNEL_OK")
</pallas_src>

<mosaic_0001>
module attributes {stable_mosaic.version = 11 : i64} {
  func.func @transformer_kernel(%arg0: memref<16x1xi32, #tpu.memory_space<vmem>>, %arg1: memref<16x1xi32, #tpu.memory_space<vmem>>, %arg2: memref<80x32xf32, #tpu.memory_space<vmem>>, %arg3: memref<32x32xf32, #tpu.memory_space<vmem>>, %arg4: memref<1x16x16xf32, #tpu.memory_space<vmem>>, %arg5: memref<2x32x96xf32, #tpu.memory_space<vmem>>, %arg6: memref<2x1x96xf32, #tpu.memory_space<vmem>>, %arg7: memref<2x32x32xf32, #tpu.memory_space<vmem>>, %arg8: memref<2x1x32xf32, #tpu.memory_space<vmem>>, %arg9: memref<2x1x32xf32, #tpu.memory_space<vmem>>, %arg10: memref<2x1x32xf32, #tpu.memory_space<vmem>>, %arg11: memref<2x32x32xf32, #tpu.memory_space<vmem>>, %arg12: memref<2x1x32xf32, #tpu.memory_space<vmem>>, %arg13: memref<2x32x32xf32, #tpu.memory_space<vmem>>, %arg14: memref<2x1x32xf32, #tpu.memory_space<vmem>>, %arg15: memref<2x1x32xf32, #tpu.memory_space<vmem>>, %arg16: memref<2x1x32xf32, #tpu.memory_space<vmem>>, %arg17: memref<32x128xf32, #tpu.memory_space<vmem>>, %arg18: memref<1x128xf32, #tpu.memory_space<vmem>>, %arg19: memref<2x128xf32, #tpu.memory_space<vmem>>) attributes {dimension_semantics = [], scalar_prefetch = 0 : i64, scratch_operands = 0 : i64, tpu.core_type = #tpu.core_type<tc>} {
    %0 = tpu.iota {dimensions = array<i32: 1>} : vector<16x80xi32>
    %c0 = arith.constant 0 : index
    %c0_0 = arith.constant 0 : index
    %1 = vector.load %arg0[%c0, %c0_0] : memref<16x1xi32, #tpu.memory_space<vmem>>, vector<16x1xi32>
    %2 = vector.broadcast %1 : vector<16x1xi32> to vector<16x80xi32>
    %3 = arith.cmpi eq, %0, %2 : vector<16x80xi32>
    %c0_1 = arith.constant 0 : index
    %c0_2 = arith.constant 0 : index
    %4 = vector.load %arg1[%c0_1, %c0_2] : memref<16x1xi32, #tpu.memory_space<vmem>>, vector<16x1xi32>
    %5 = vector.broadcast %4 : vector<16x1xi32> to vector<16x80xi32>
    %6 = arith.cmpi eq, %0, %5 : vector<16x80xi32>
    %7 = arith.ori %3, %6 : vector<16x80xi1>
    %8 = arith.extui %7 : vector<16x80xi1> to vector<16x80xi32>
    %9 = arith.sitofp %8 : vector<16x80xi32> to vector<16x80xf32>
    %c0_3 = arith.constant 0 : index
    %c0_4 = arith.constant 0 : index
    %10 = vector.load %arg2[%c0_3, %c0_4] : memref<80x32xf32, #tpu.memory_space<vmem>>, vector<80x32xf32>
    %cst = arith.constant dense<0.000000e+00> : vector<16x32xf32>
    %11 = tpu.matmul %9, %10, %cst {dimension_numbers = #tpu.dot_dimension_numbers<[1], [0], [0], [1], [0, 0, 1, 1], [], []>} : vector<16x80xf32>, vector<80x32xf32>, vector<16x32xf32> -> vector<16x32xf32>
    %c0_5 = arith.constant 0 : index
    %c0_6 = arith.constant 0 : index
    %12 = vector.load %arg3[%c0_5, %c0_6] : memref<32x32xf32, #tpu.memory_space<vmem>>, vector<32x32xf32>
    %c0_7 = arith.constant 0 : index
    %c0_8 = arith.constant 0 : index
    %c0_9 = arith.constant 0 : index
    %13 = vector.load %arg5[%c0_7, %c0_8, %c0_9] : memref<2x32x96xf32, #tpu.memory_space<vmem>>, vector<1x32x96xf32>
    %14 = vector.shape_cast %13 : vector<1x32x96xf32> to vector<32x96xf32>
    %cst_10 = arith.constant dense<0.000000e+00> : vector<16x96xf32>
    %15 = tpu.matmul %11, %14, %cst_10 {dimension_numbers = #tpu.dot_dimension_numbers<[1], [0], [0], [1], [0, 0, 1, 1], [], []>} : vector<16x32xf32>, vector<32x96xf32>, vector<16x96xf32> -> vector<16x96xf32>
    %c0_11 = arith.constant 0 : index
    %c0_12 = arith.constant 0 : index
    %c0_13 = arith.constant 0 : index
    %16 = vector.load %arg6[%c0_11, %c0_12, %c0_13] : memref<2x1x96xf32, #tpu.memory_space<vmem>>, vector<1x1x96xf32>
    %17 = vector.shape_cast %16 : vector<1x1x96xf32> to vector<1x96xf32>
    %18 = vector.broadcast %17 : vector<1x96xf32> to vector<16x96xf32>
    %19 = arith.addf %15, %18 : vector<16x96xf32>
    %20 = vector.extract_strided_slice %19 {offsets = [0, 0], sizes = [16, 32], strides = [1, 1]} : vector<16x96xf32> to vector<16x32xf32>
    %21 = vector.extract_strided_slice %19 {offsets = [0, 32], sizes = [16, 32], strides = [1, 1]} : vector<16x96xf32> to vector<16x32xf32>
    %22 = vector.extract_strided_slice %19 {offsets = [0, 64], sizes = [16, 32], strides = [1, 1]} : vector<16x96xf32> to vector<16x32xf32>
    %c0_14 = arith.constant 0 : index
    %c0_15 = arith.constant 0 : index
    %c0_16 = arith.constant 0 : index
    %23 = vector.load %arg4[%c0_14, %c0_15, %c0_16] : memref<1x16x16xf32, #tpu.memory_space<vmem>>, vector<1x16x16xf32>
    %24 = vector.shape_cast %23 : vector<1x16x16xf32> to vector<16x16xf32>
    %cst_17 = arith.constant dense<0.000000e+00> : vector<16x32xf32>
    %25 = tpu.matmul %24, %21, %cst_17 {dimension_numbers = #tpu.dot_dimension_numbers<[1], [0], [0], [1], [0, 0, 1, 1], [], []>} : vector<16x16xf32>, vector<16x32xf32>, vector<16x32xf32> -> vector<16x32xf32>
    %c0_18 = arith.constant 0 : index
    %c0_19 = arith.constant 0 : index
    %c0_20 = arith.constant 0 : index
    %26 = vector.load %arg4[%c0_18, %c0_19, %c0_20] : memref<1x16x16xf32, #tpu.memory_space<vmem>>, vector<1x16x16xf32>
    %27 = vector.shape_cast %26 : vector<1x16x16xf32> to vector<16x16xf32>
    %cst_21 = arith.constant dense<0.000000e+00> : vector<16x32xf32>
    %28 = tpu.matmul %27, %22, %cst_21 {dimension_numbers = #tpu.dot_dimension_numbers<[1], [0], [0], [1], [0, 0, 1, 1], [], []>} : vector<16x16xf32>, vector<16x32xf32>, vector<16x32xf32> -> vector<16x32xf32>
    %29 = arith.mulf %20, %21 : vector<16x32xf32>
    %cst_22 = arith.constant dense<0.000000e+00> : vector<16x32xf32>
    %30 = tpu.matmul %29, %12, %cst_22 {dimension_numbers = #tpu.dot_dimension_numbers<[1], [0], [0], [1], [0, 0, 1, 1], [], []>} : vector<16x32xf32>, vector<32x32xf32>, vector<16x32xf32> -> vector<16x32xf32>
    %31 = arith.mulf %20, %25 : vector<16x32xf32>
    %cst_23 = arith.constant dense<0.000000e+00> : vector<16x32xf32>
    %32 = tpu.matmul %31, %12, %cst_23 {dimension_numbers = #tpu.dot_dimension_numbers<[1], [0], [0], [1], [0, 0, 1, 1], [], []>} : vector<16x32xf32>, vector<32x32xf32>, vector<16x32xf32> -> vector<16x32xf32>
    %33 = arith.maximumf %30, %32 : vector<16x32xf32>
    %34 = arith.subf %30, %33 : vector<16x32xf32>
    %35 = math.exp %34 : vector<16x32xf32>
    %36 = arith.subf %32, %33 : vector<16x32xf32>
    %37 = math.exp %36 : vector<16x32xf32>
    %38 = arith.addf %35, %37 : vector<16x32xf32>
    %39 = tpu.reciprocal %38 {approx = true} : vector<16x32xf32> -> vector<16x32xf32>
    %40 = arith.mulf %35, %22 : vector<16x32xf32>
    %41 = arith.mulf %37, %28 : vector<16x32xf32>
    %42 = arith.addf %40, %41 : vector<16x32xf32>
    %43 = arith.mulf %42, %39 : vector<16x32xf32>
    %c0_24 = arith.constant 0 : index
    %c0_25 = arith.constant 0 : index
    %c0_26 = arith.constant 0 : index
    %44 = vector.load %arg7[%c0_24, %c0_25, %c0_26] : memref<2x32x32xf32, #tpu.memory_space<vmem>>, vector<1x32x32xf32>
    %45 = vector.shape_cast %44 : vector<1x32x32xf32> to vector<32x32xf32>
    %cst_27 = arith.constant dense<0.000000e+00> : vector<16x32xf32>
    %46 = tpu.matmul %43, %45, %cst_27 {dimension_numbers = #tpu.dot_dimension_numbers<[1], [0], [0], [1], [0, 0, 1, 1], [], []>} : vector<16x32xf32>, vector<32x32xf32>, vector<16x32xf32> -> vector<16x32xf32>
    %c0_28 = arith.constant 0 : index
    %c0_29 = arith.constant 0 : index
    %c0_30 = arith.constant 0 : index
    %47 = vector.load %arg8[%c0_28, %c0_29, %c0_30] : memref<2x1x32xf32, #tpu.memory_space<vmem>>, vector<1x1x32xf32>
    %48 = vector.shape_cast %47 : vector<1x1x32xf32> to vector<1x32xf32>
    %49 = vector.broadcast %48 : vector<1x32xf32> to vector<16x32xf32>
    %50 = arith.addf %46, %49 : vector<16x32xf32>
    %51 = arith.addf %11, %50 : vector<16x32xf32>
    %c0_31 = arith.constant 0 : index
    %c0_32 = arith.constant 0 : index
    %c0_33 = arith.constant 0 : index
    %52 = vector.load %arg9[%c0_31, %c0_32, %c0_33] : memref<2x1x32xf32, #tpu.memory_space<vmem>>, vector<1x1x32xf32>
    %53 = vector.shape_cast %52 : vector<1x1x32xf32> to vector<1x32xf32>
    %c0_34 = arith.constant 0 : index
    %c0_35 = arith.constant 0 : index
    %c0_36 = arith.constant 0 : index
    %54 = vector.load %arg10[%c0_34, %c0_35, %c0_36] : memref<2x1x32xf32, #tpu.memory_space<vmem>>, vector<1x1x32xf32>
    %55 = vector.shape_cast %54 : vector<1x1x32xf32> to vector<1x32xf32>
    %cst_37 = arith.constant dense<0.000000e+00> : vector<16xf32>
    %56 = vector.multi_reduction <add>, %51, %cst_37 [1] : vector<16x32xf32> to vector<16xf32>
    %57 = vector.shape_cast %56 : vector<16xf32> to vector<16x1xf32>
    %cst_38 = arith.constant 3.200000e+01 : f32
    %58 = vector.broadcast %cst_38 : f32 to vector<16x1xf32>
    %59 = arith.divf %57, %58 : vector<16x1xf32>
    %60 = vector.broadcast %59 : vector<16x1xf32> to vector<16x32xf32>
    %61 = arith.subf %51, %60 : vector<16x32xf32>
    %62 = arith.mulf %61, %61 : vector<16x32xf32>
    %cst_39 = arith.constant dense<0.000000e+00> : vector<16xf32>
    %63 = vector.multi_reduction <add>, %62, %cst_39 [1] : vector<16x32xf32> to vector<16xf32>
    %64 = vector.shape_cast %63 : vector<16xf32> to vector<16x1xf32>
    %cst_40 = arith.constant 3.200000e+01 : f32
    %65 = vector.broadcast %cst_40 : f32 to vector<16x1xf32>
    %66 = arith.divf %64, %65 : vector<16x1xf32>
    %67 = vector.broadcast %59 : vector<16x1xf32> to vector<16x32xf32>
    %68 = arith.subf %51, %67 : vector<16x32xf32>
    %cst_41 = arith.constant 9.99999974E-6 : f32
    %69 = vector.broadcast %cst_41 : f32 to vector<16x1xf32>
    %70 = arith.addf %66, %69 : vector<16x1xf32>
    %71 = math.rsqrt %70 : vector<16x1xf32>
    %72 = vector.broadcast %71 : vector<16x1xf32> to vector<16x32xf32>
    %73 = arith.mulf %68, %72 : vector<16x32xf32>
    %74 = vector.broadcast %53 : vector<1x32xf32> to vector<16x32xf32>
    %75 = arith.mulf %73, %74 : vector<16x32xf32>
    %76 = vector.broadcast %55 : vector<1x32xf32> to vector<16x32xf32>
    %77 = arith.addf %75, %76 : vector<16x32xf32>
    %c0_42 = arith.constant 0 : index
    %c0_43 = arith.constant 0 : index
    %c0_44 = arith.constant 0 : index
    %78 = vector.load %arg11[%c0_42, %c0_43, %c0_44] : memref<2x32x32xf32, #tpu.memory_space<vmem>>, vector<1x32x32xf32>
    %79 = vector.shape_cast %78 : vector<1x32x32xf32> to vector<32x32xf32>
    %cst_45 = arith.constant dense<0.000000e+00> : vector<16x32xf32>
    %80 = tpu.matmul %77, %79, %cst_45 {dimension_numbers = #tpu.dot_dimension_numbers<[1], [0], [0], [1], [0, 0, 1, 1], [], []>} : vector<16x32xf32>, vector<32x32xf32>, vector<16x32xf32> -> vector<16x32xf32>
    %c0_46 = arith.constant 0 : index
    %c0_47 = arith.constant 0 : index
    %c0_48 = arith.constant 0 : index
    %81 = vector.load %arg12[%c0_46, %c0_47, %c0_48] : memref<2x1x32xf32, #tpu.memory_space<vmem>>, vector<1x1x32xf32>
    %82 = vector.shape_cast %81 : vector<1x1x32xf32> to vector<1x32xf32>
    %83 = vector.broadcast %82 : vector<1x32xf32> to vector<16x32xf32>
    %84 = arith.addf %80, %83 : vector<16x32xf32>
    %cst_49 = arith.constant 0.000000e+00 : f32
    %85 = vector.broadcast %cst_49 : f32 to vector<16x32xf32>
    %86 = arith.maximumf %84, %85 : vector<16x32xf32>
    %c0_50 = arith.constant 0 : index
    %c0_51 = arith.constant 0 : index
    %c0_52 = arith.constant 0 : index
    %87 = vector.load %arg13[%c0_50, %c0_51, %c0_52] : memref<2x32x32xf32, #tpu.memory_space<vmem>>, vector<1x32x32xf32>
    %88 = vector.shape_cast %87 : vector<1x32x32xf32> to vector<32x32xf32>
    %cst_53 = arith.constant dense<0.000000e+00> : vector<16x32xf32>
    %89 = tpu.matmul %86, %88, %cst_53 {dimension_numbers = #tpu.dot_dimension_numbers<[1], [0], [0], [1], [0, 0, 1, 1], [], []>} : vector<16x32xf32>, vector<32x32xf32>, vector<16x32xf32> -> vector<16x32xf32>
    %c0_54 = arith.constant 0 : index
    %c0_55 = arith.constant 0 : index
    %c0_56 = arith.constant 0 : index
    %90 = vector.load %arg14[%c0_54, %c0_55, %c0_56] : memref<2x1x32xf32, #tpu.memory_space<vmem>>, vector<1x1x32xf32>
    %91 = vector.shape_cast %90 : vector<1x1x32xf32> to vector<1x32xf32>
    %92 = vector.broadcast %91 : vector<1x32xf32> to vector<16x32xf32>
    %93 = arith.addf %89, %92 : vector<16x32xf32>
    %94 = arith.addf %77, %93 : vector<16x32xf32>
    %c0_57 = arith.constant 0 : index
    %c0_58 = arith.constant 0 : index
    %c0_59 = arith.constant 0 : index
    %95 = vector.load %arg15[%c0_57, %c0_58, %c0_59] : memref<2x1x32xf32, #tpu.memory_space<vmem>>, vector<1x1x32xf32>
    %96 = vector.shape_cast %95 : vector<1x1x32xf32> to vector<1x32xf32>
    %c0_60 = arith.constant 0 : index
    %c0_61 = arith.constant 0 : index
    %c0_62 = arith.constant 0 : index
    %97 = vector.load %arg16[%c0_60, %c0_61, %c0_62] : memref<2x1x32xf32, #tpu.memory_space<vmem>>, vector<1x1x32xf32>
    %98 = vector.shape_cast %97 : vector<1x1x32xf32> to vector<1x32xf32>
    %cst_63 = arith.constant dense<0.000000e+00> : vector<16xf32>
    %99 = vector.multi_reduction <add>, %94, %cst_63 [1] : vector<16x32xf32> to vector<16xf32>
    %100 = vector.shape_cast %99 : vector<16xf32> to vector<16x1xf32>
    %cst_64 = arith.constant 3.200000e+01 : f32
    %101 = vector.broadcast %cst_64 : f32 to vector<16x1xf32>
    %102 = arith.divf %100, %101 : vector<16x1xf32>
    %103 = vector.broadcast %102 : vector<16x1xf32> to vector<16x32xf32>
    %104 = arith.subf %94, %103 : vector<16x32xf32>
    %105 = arith.mulf %104, %104 : vector<16x32xf32>
    %cst_65 = arith.constant dense<0.000000e+00> : vector<16xf32>
    %106 = vector.multi_reduction <add>, %105, %cst_65 [1] : vector<16x32xf32> to vector<16xf32>
    %107 = vector.shape_cast %106 : vector<16xf32> to vector<16x1xf32>
    %cst_66 = arith.constant 3.200000e+01 : f32
    %108 = vector.broadcast %cst_66 : f32 to vector<16x1xf32>
    %109 = arith.divf %107, %108 : vector<16x1xf32>
    %110 = vector.broadcast %102 : vector<16x1xf32> to vector<16x32xf32>
    %111 = arith.subf %94, %110 : vector<16x32xf32>
    %cst_67 = arith.constant 9.99999974E-6 : f32
    %112 = vector.broadcast %cst_67 : f32 to vector<16x1xf32>
    %113 = arith.addf %109, %112 : vector<16x1xf32>
    %114 = math.rsqrt %113 : vector<16x1xf32>
    %115 = vector.broadcast %114 : vector<16x1xf32> to vector<16x32xf32>
    %116 = arith.mulf %111, %115 : vector<16x32xf32>
    %117 = vector.broadcast %96 : vector<1x32xf32> to vector<16x32xf32>
    %118 = arith.mulf %116, %117 : vector<16x32xf32>
    %119 = vector.broadcast %98 : vector<1x32xf32> to vector<16x32xf32>
    %120 = arith.addf %118, %119 : vector<16x32xf32>
    %c1 = arith.constant 1 : index
    %c0_68 = arith.constant 0 : index
    %c0_69 = arith.constant 0 : index
    %121 = vector.load %arg5[%c1, %c0_68, %c0_69] : memref<2x32x96xf32, #tpu.memory_space<vmem>>, vector<1x32x96xf32>
    %122 = vector.shape_cast %121 : vector<1x32x96xf32> to vector<32x96xf32>
    %cst_70 = arith.constant dense<0.000000e+00> : vector<16x96xf32>
    %123 = tpu.matmul %120, %122, %cst_70 {dimension_numbers = #tpu.dot_dimension_numbers<[1], [0], [0], [1], [0, 0, 1, 1], [], []>} : vector<16x32xf32>, vector<32x96xf32>, vector<16x96xf32> -> vector<16x96xf32>
    %c1_71 = arith.constant 1 : index
    %c0_72 = arith.constant 0 : index
    %c0_73 = arith.constant 0 : index
    %124 = vector.load %arg6[%c1_71, %c0_72, %c0_73] : memref<2x1x96xf32, #tpu.memory_space<vmem>>, vector<1x1x96xf32>
    %125 = vector.shape_cast %124 : vector<1x1x96xf32> to vector<1x96xf32>
    %126 = vector.broadcast %125 : vector<1x96xf32> to vector<16x96xf32>
    %127 = arith.addf %123, %126 : vector<16x96xf32>
    %128 = vector.extract_strided_slice %127 {offsets = [0, 0], sizes = [16, 32], strides = [1, 1]} : vector<16x96xf32> to vector<16x32xf32>
    %129 = vector.extract_strided_slice %127 {offsets = [0, 32], sizes = [16, 32], strides = [1, 1]} : vector<16x96xf32> to vector<16x32xf32>
    %130 = vector.extract_strided_slice %127 {offsets = [0, 64], sizes = [16, 32], strides = [1, 1]} : vector<16x96xf32> to vector<16x32xf32>
    %c0_74 = arith.constant 0 : index
    %c0_75 = arith.constant 0 : index
    %c0_76 = arith.constant 0 : index
    %131 = vector.load %arg4[%c0_74, %c0_75, %c0_76] : memref<1x16x16xf32, #tpu.memory_space<vmem>>, vector<1x16x16xf32>
    %132 = vector.shape_cast %131 : vector<1x16x16xf32> to vector<16x16xf32>
    %cst_77 = arith.constant dense<0.000000e+00> : vector<16x32xf32>
    %133 = tpu.matmul %132, %129, %cst_77 {dimension_numbers = #tpu.dot_dimension_numbers<[1], [0], [0], [1], [0, 0, 1, 1], [], []>} : vector<16x16xf32>, vector<16x32xf32>, vector<16x32xf32> -> vector<16x32xf32>
    %c0_78 = arith.constant 0 : index
    %c0_79 = arith.constant 0 : index
    %c0_80 = arith.constant 0 : index
    %134 = vector.load %arg4[%c0_78, %c0_79, %c0_80] : memref<1x16x16xf32, #tpu.memory_space<vmem>>, vector<1x16x16xf32>
    %135 = vector.shape_cast %134 : vector<1x16x16xf32> to vector<16x16xf32>
    %cst_81 = arith.constant dense<0.000000e+00> : vector<16x32xf32>
    %136 = tpu.matmul %135, %130, %cst_81 {dimension_numbers = #tpu.dot_dimension_numbers<[1], [0], [0], [1], [0, 0, 1, 1], [], []>} : vector<16x16xf32>, vector<16x32xf32>, vector<16x32xf32> -> vector<16x32xf32>
    %137 = arith.mulf %128, %129 : vector<16x32xf32>
    %cst_82 = arith.constant dense<0.000000e+00> : vector<16x32xf32>
    %138 = tpu.matmul %137, %12, %cst_82 {dimension_numbers = #tpu.dot_dimension_numbers<[1], [0], [0], [1], [0, 0, 1, 1], [], []>} : vector<16x32xf32>, vector<32x32xf32>, vector<16x32xf32> -> vector<16x32xf32>
    %139 = arith.mulf %128, %133 : vector<16x32xf32>
    %cst_83 = arith.constant dense<0.000000e+00> : vector<16x32xf32>
    %140 = tpu.matmul %139, %12, %cst_83 {dimension_numbers = #tpu.dot_dimension_numbers<[1], [0], [0], [1], [0, 0, 1, 1], [], []>} : vector<16x32xf32>, vector<32x32xf32>, vector<16x32xf32> -> vector<16x32xf32>
    %141 = arith.maximumf %138, %140 : vector<16x32xf32>
    %142 = arith.subf %138, %141 : vector<16x32xf32>
    %143 = math.exp %142 : vector<16x32xf32>
    %144 = arith.subf %140, %141 : vector<16x32xf32>
    %145 = math.exp %144 : vector<16x32xf32>
    %146 = arith.addf %143, %145 : vector<16x32xf32>
    %147 = tpu.reciprocal %146 {approx = true} : vector<16x32xf32> -> vector<16x32xf32>
    %148 = arith.mulf %143, %130 : vector<16x32xf32>
    %149 = arith.mulf %145, %136 : vector<16x32xf32>
    %150 = arith.addf %148, %149 : vector<16x32xf32>
    %151 = arith.mulf %150, %147 : vector<16x32xf32>
    %c1_84 = arith.constant 1 : index
    %c0_85 = arith.constant 0 : index
    %c0_86 = arith.constant 0 : index
    %152 = vector.load %arg7[%c1_84, %c0_85, %c0_86] : memref<2x32x32xf32, #tpu.memory_space<vmem>>, vector<1x32x32xf32>
    %153 = vector.shape_cast %152 : vector<1x32x32xf32> to vector<32x32xf32>
    %cst_87 = arith.constant dense<0.000000e+00> : vector<16x32xf32>
    %154 = tpu.matmul %151, %153, %cst_87 {dimension_numbers = #tpu.dot_dimension_numbers<[1], [0], [0], [1], [0, 0, 1, 1], [], []>} : vector<16x32xf32>, vector<32x32xf32>, vector<16x32xf32> -> vector<16x32xf32>
    %c1_88 = arith.constant 1 : index
    %c0_89 = arith.constant 0 : index
    %c0_90 = arith.constant 0 : index
    %155 = vector.load %arg8[%c1_88, %c0_89, %c0_90] : memref<2x1x32xf32, #tpu.memory_space<vmem>>, vector<1x1x32xf32>
    %156 = vector.shape_cast %155 : vector<1x1x32xf32> to vector<1x32xf32>
    %157 = vector.broadcast %156 : vector<1x32xf32> to vector<16x32xf32>
    %158 = arith.addf %154, %157 : vector<16x32xf32>
    %159 = arith.addf %120, %158 : vector<16x32xf32>
    %c1_91 = arith.constant 1 : index
    %c0_92 = arith.constant 0 : index
    %c0_93 = arith.constant 0 : index
    %160 = vector.load %arg9[%c1_91, %c0_92, %c0_93] : memref<2x1x32xf32, #tpu.memory_space<vmem>>, vector<1x1x32xf32>
    %161 = vector.shape_cast %160 : vector<1x1x32xf32> to vector<1x32xf32>
    %c1_94 = arith.constant 1 : index
    %c0_95 = arith.constant 0 : index
    %c0_96 = arith.constant 0 : index
    %162 = vector.load %arg10[%c1_94, %c0_95, %c0_96] : memref<2x1x32xf32, #tpu.memory_space<vmem>>, vector<1x1x32xf32>
    %163 = vector.shape_cast %162 : vector<1x1x32xf32> to vector<1x32xf32>
    %cst_97 = arith.constant dense<0.000000e+00> : vector<16xf32>
    %164 = vector.multi_reduction <add>, %159, %cst_97 [1] : vector<16x32xf32> to vector<16xf32>
    %165 = vector.shape_cast %164 : vector<16xf32> to vector<16x1xf32>
    %cst_98 = arith.constant 3.200000e+01 : f32
    %166 = vector.broadcast %cst_98 : f32 to vector<16x1xf32>
    %167 = arith.divf %165, %166 : vector<16x1xf32>
    %168 = vector.broadcast %167 : vector<16x1xf32> to vector<16x32xf32>
    %169 = arith.subf %159, %168 : vector<16x32xf32>
    %170 = arith.mulf %169, %169 : vector<16x32xf32>
    %cst_99 = arith.constant dense<0.000000e+00> : vector<16xf32>
    %171 = vector.multi_reduction <add>, %170, %cst_99 [1] : vector<16x32xf32> to vector<16xf32>
    %172 = vector.shape_cast %171 : vector<16xf32> to vector<16x1xf32>
    %cst_100 = arith.constant 3.200000e+01 : f32
    %173 = vector.broadcast %cst_100 : f32 to vector<16x1xf32>
    %174 = arith.divf %172, %173 : vector<16x1xf32>
    %175 = vector.broadcast %167 : vector<16x1xf32> to vector<16x32xf32>
    %176 = arith.subf %159, %175 : vector<16x32xf32>
    %cst_101 = arith.constant 9.99999974E-6 : f32
    %177 = vector.broadcast %cst_101 : f32 to vector<16x1xf32>
    %178 = arith.addf %174, %177 : vector<16x1xf32>
    %179 = math.rsqrt %178 : vector<16x1xf32>
    %180 = vector.broadcast %179 : vector<16x1xf32> to vector<16x32xf32>
    %181 = arith.mulf %176, %180 : vector<16x32xf32>
    %182 = vector.broadcast %161 : vector<1x32xf32> to vector<16x32xf32>
    %183 = arith.mulf %181, %182 : vector<16x32xf32>
    %184 = vector.broadcast %163 : vector<1x32xf32> to vector<16x32xf32>
    %185 = arith.addf %183, %184 : vector<16x32xf32>
    %c1_102 = arith.constant 1 : index
    %c0_103 = arith.constant 0 : index
    %c0_104 = arith.constant 0 : index
    %186 = vector.load %arg11[%c1_102, %c0_103, %c0_104] : memref<2x32x32xf32, #tpu.memory_space<vmem>>, vector<1x32x32xf32>
    %187 = vector.shape_cast %186 : vector<1x32x32xf32> to vector<32x32xf32>
    %cst_105 = arith.constant dense<0.000000e+00> : vector<16x32xf32>
    %188 = tpu.matmul %185, %187, %cst_105 {dimension_numbers = #tpu.dot_dimension_numbers<[1], [0], [0], [1], [0, 0, 1, 1], [], []>} : vector<16x32xf32>, vector<32x32xf32>, vector<16x32xf32> -> vector<16x32xf32>
    %c1_106 = arith.constant 1 : index
    %c0_107 = arith.constant 0 : index
    %c0_108 = arith.constant 0 : index
    %189 = vector.load %arg12[%c1_106, %c0_107, %c0_108] : memref<2x1x32xf32, #tpu.memory_space<vmem>>, vector<1x1x32xf32>
    %190 = vector.shape_cast %189 : vector<1x1x32xf32> to vector<1x32xf32>
    %191 = vector.broadcast %190 : vector<1x32xf32> to vector<16x32xf32>
    %192 = arith.addf %188, %191 : vector<16x32xf32>
    %cst_109 = arith.constant 0.000000e+00 : f32
    %193 = vector.broadcast %cst_109 : f32 to vector<16x32xf32>
    %194 = arith.maximumf %192, %193 : vector<16x32xf32>
    %c1_110 = arith.constant 1 : index
    %c0_111 = arith.constant 0 : index
    %c0_112 = arith.constant 0 : index
    %195 = vector.load %arg13[%c1_110, %c0_111, %c0_112] : memref<2x32x32xf32, #tpu.memory_space<vmem>>, vector<1x32x32xf32>
    %196 = vector.shape_cast %195 : vector<1x32x32xf32> to vector<32x32xf32>
    %cst_113 = arith.constant dense<0.000000e+00> : vector<16x32xf32>
    %197 = tpu.matmul %194, %196, %cst_113 {dimension_numbers = #tpu.dot_dimension_numbers<[1], [0], [0], [1], [0, 0, 1, 1], [], []>} : vector<16x32xf32>, vector<32x32xf32>, vector<16x32xf32> -> vector<16x32xf32>
    %c1_114 = arith.constant 1 : index
    %c0_115 = arith.constant 0 : index
    %c0_116 = arith.constant 0 : index
    %198 = vector.load %arg14[%c1_114, %c0_115, %c0_116] : memref<2x1x32xf32, #tpu.memory_space<vmem>>, vector<1x1x32xf32>
    %199 = vector.shape_cast %198 : vector<1x1x32xf32> to vector<1x32xf32>
    %200 = vector.broadcast %199 : vector<1x32xf32> to vector<16x32xf32>
    %201 = arith.addf %197, %200 : vector<16x32xf32>
    %202 = arith.addf %185, %201 : vector<16x32xf32>
    %c1_117 = arith.constant 1 : index
    %c0_118 = arith.constant 0 : index
    %c0_119 = arith.constant 0 : index
    %203 = vector.load %arg15[%c1_117, %c0_118, %c0_119] : memref<2x1x32xf32, #tpu.memory_space<vmem>>, vector<1x1x32xf32>
    %204 = vector.shape_cast %203 : vector<1x1x32xf32> to vector<1x32xf32>
    %c1_120 = arith.constant 1 : index
    %c0_121 = arith.constant 0 : index
    %c0_122 = arith.constant 0 : index
    %205 = vector.load %arg16[%c1_120, %c0_121, %c0_122] : memref<2x1x32xf32, #tpu.memory_space<vmem>>, vector<1x1x32xf32>
    %206 = vector.shape_cast %205 : vector<1x1x32xf32> to vector<1x32xf32>
    %cst_123 = arith.constant dense<0.000000e+00> : vector<16xf32>
    %207 = vector.multi_reduction <add>, %202, %cst_123 [1] : vector<16x32xf32> to vector<16xf32>
    %208 = vector.shape_cast %207 : vector<16xf32> to vector<16x1xf32>
    %cst_124 = arith.constant 3.200000e+01 : f32
    %209 = vector.broadcast %cst_124 : f32 to vector<16x1xf32>
    %210 = arith.divf %208, %209 : vector<16x1xf32>
    %211 = vector.broadcast %210 : vector<16x1xf32> to vector<16x32xf32>
    %212 = arith.subf %202, %211 : vector<16x32xf32>
    %213 = arith.mulf %212, %212 : vector<16x32xf32>
    %cst_125 = arith.constant dense<0.000000e+00> : vector<16xf32>
    %214 = vector.multi_reduction <add>, %213, %cst_125 [1] : vector<16x32xf32> to vector<16xf32>
    %215 = vector.shape_cast %214 : vector<16xf32> to vector<16x1xf32>
    %cst_126 = arith.constant 3.200000e+01 : f32
    %216 = vector.broadcast %cst_126 : f32 to vector<16x1xf32>
    %217 = arith.divf %215, %216 : vector<16x1xf32>
    %218 = vector.broadcast %210 : vector<16x1xf32> to vector<16x32xf32>
    %219 = arith.subf %202, %218 : vector<16x32xf32>
    %cst_127 = arith.constant 9.99999974E-6 : f32
    %220 = vector.broadcast %cst_127 : f32 to vector<16x1xf32>
    %221 = arith.addf %217, %220 : vector<16x1xf32>
    %222 = math.rsqrt %221 : vector<16x1xf32>
    %223 = vector.broadcast %222 : vector<16x1xf32> to vector<16x32xf32>
    %224 = arith.mulf %219, %223 : vector<16x32xf32>
    %225 = vector.broadcast %204 : vector<1x32xf32> to vector<16x32xf32>
    %226 = arith.mulf %224, %225 : vector<16x32xf32>
    %227 = vector.broadcast %206 : vector<1x32xf32> to vector<16x32xf32>
    %228 = arith.addf %226, %227 : vector<16x32xf32>
    %229 = vector.extract_strided_slice %228 {offsets = [0, 0], sizes = [2, 32], strides = [1, 1]} : vector<16x32xf32> to vector<2x32xf32>
    %c0_128 = arith.constant 0 : index
    %c0_129 = arith.constant 0 : index
    %230 = vector.load %arg17[%c0_128, %c0_129] : memref<32x128xf32, #tpu.memory_space<vmem>>, vector<32x128xf32>
    %cst_130 = arith.constant dense<0.000000e+00> : vector<2x128xf32>
    %231 = tpu.matmul %229, %230, %cst_130 {dimension_numbers = #tpu.dot_dimension_numbers<[1], [0], [0], [1], [0, 0, 1, 1], [], []>} : vector<2x32xf32>, vector<32x128xf32>, vector<2x128xf32> -> vector<2x128xf32>
    %c0_131 = arith.constant 0 : index
    %c0_132 = arith.constant 0 : index
    %232 = vector.load %arg18[%c0_131, %c0_132] : memref<1x128xf32, #tpu.memory_space<vmem>>, vector<1x128xf32>
    %233 = vector.broadcast %232 : vector<1x128xf32> to vector<2x128xf32>
    %234 = arith.addf %231, %233 : vector<2x128xf32>
    %c0_133 = arith.constant 0 : index
    %c0_134 = arith.constant 0 : index
    %235 = vector.load %arg19[%c0_133, %c0_134] : memref<2x128xf32, #tpu.memory_space<vmem>>, vector<2x128xf32>
    tpu.vector_store %arg19[%c0_133, %c0_134], %234 {strides = array<i32>} : memref<2x128xf32, #tpu.memory_space<vmem>>, vector<2x128xf32>,
    return
  }
}

</mosaic_0001>

<llo_original>
// kernel: transformer_forward.1
$region0: #{transformer_forward.1}
  #allocation0 [shape = 'u32[]', space=smem, size = 0x4, offset = 0x4, fixed_abs, tag = 'smem constant byte address 0x4 - core index']
  #allocation1 [shape = 'u32[144,128]{1,0:T(1,128)}', space=vmem, size = 0x12000, scoped, tag = 'internal scratch']
  %s0 = inlined_call_operand.vmem [shape: s32[16,1], index: 0, kind: input, shape index: {}]
  %s1 = inlined_call_operand.vmem [shape: s32[16,1], index: 1, kind: input, shape index: {}]
  %s2 = inlined_call_operand.vmem [shape: f32[80,32], index: 2, kind: input, shape index: {}]
  %s3 = inlined_call_operand.vmem [shape: f32[32,32], index: 3, kind: input, shape index: {}]
  %s4 = inlined_call_operand.vmem [shape: f32[1,16,16], index: 4, kind: input, shape index: {}]
  %s5 = inlined_call_operand.vmem [shape: f32[2,32,96], index: 5, kind: input, shape index: {}]
  %s6 = inlined_call_operand.vmem [shape: f32[2,1,96], index: 6, kind: input, shape index: {}]
  %s7 = inlined_call_operand.vmem [shape: f32[2,32,32], index: 7, kind: input, shape index: {}]
  %s8 = inlined_call_operand.vmem [shape: f32[2,1,32], index: 8, kind: input, shape index: {}]
  %s9 = inlined_call_operand.vmem [shape: f32[2,1,32], index: 9, kind: input, shape index: {}]
  %s10 = inlined_call_operand.vmem [shape: f32[2,1,32], index: 10, kind: input, shape index: {}]
  %s11 = inlined_call_operand.vmem [shape: f32[2,32,32], index: 11, kind: input, shape index: {}]
  %s12 = inlined_call_operand.vmem [shape: f32[2,1,32], index: 12, kind: input, shape index: {}]
  %s13 = inlined_call_operand.vmem [shape: f32[2,32,32], index: 13, kind: input, shape index: {}]
  %s14 = inlined_call_operand.vmem [shape: f32[2,1,32], index: 14, kind: input, shape index: {}]
  %s15 = inlined_call_operand.vmem [shape: f32[2,1,32], index: 15, kind: input, shape index: {}]
  %s16 = inlined_call_operand.vmem [shape: f32[2,1,32], index: 16, kind: input, shape index: {}]
  %s17 = inlined_call_operand.vmem [shape: f32[32,128], index: 17, kind: input, shape index: {}]
  %s18 = inlined_call_operand.vmem [shape: f32[1,128], index: 18, kind: input, shape index: {}]
  %s19 = inlined_call_operand.hbm [shape: f32[2,128], index: 19, kind: output, shape index: {}]
  %s20 = sld [smem:[#allocation0]]
  $region86: #{transformer_forward.1} parent=0
    _
  %s22 = ssub.s32 1, %s20
  %s23 = scalar_select 0, %s22, %s20
  $region1: #{transformer_forward.1} parent=0
    #allocation2 [shape = 'u8[1024]{0}', space=vmem, size = 0x400, scoped, tag = 'output window, operand 0, single buffered']
    #allocation3 [shape = 's32[1]{0}', space=sflag, size = 0x4, scoped, tag = 'scoped memory for transformer_forward.1']
    %24 = vsyncpa [#allocation3], 0
    // Predicated region
    $region2: #{transformer_forward.1} parent=1 // pred_check
      _
    $region3: #{transformer_forward.1} parent=1 // pred_check_branch
      %26 = sbr.rel (0) target = $region5
    $region4: #{transformer_forward.1} parent=1 // pred_region
      _
    $region5: #{transformer_forward.1} parent=1 // pred_fallthru
      _
    // Predicated region
    $region6: #{transformer_forward.1} parent=1 // pred_check
      _
    $region7: #{transformer_forward.1} parent=1 // pred_check_branch
      %28 = sbr.rel (0) target = $region9
    $region8: #{transformer_forward.1} parent=1 // pred_region
      _
    $region9: #{transformer_forward.1} parent=1 // pred_fallthru
      _
    // Predicated region
    $region10: #{transformer_forward.1} parent=1 // pred_check
      _
    $region11: #{transformer_forward.1} parent=1 // pred_check_branch
      %30 = sbr.rel (0) target = $region13
    $region12: #{transformer_forward.1} parent=1 // pred_region
      _
    $region13: #{transformer_forward.1} parent=1 // pred_fallthru
      _
    // Predicated region
    $region14: #{transformer_forward.1} parent=1 // pred_check
      _
    $region15: #{transformer_forward.1} parent=1 // pred_check_branch
      %32 = sbr.rel (0) target = $region17
    $region16: #{transformer_forward.1} parent=1 // pred_region
      _
    $region17: #{transformer_forward.1} parent=1 // pred_fallthru
      _
    // Predicated region
    $region18: #{transformer_forward.1} parent=1 // pred_check
      _
    $region19: #{transformer_forward.1} parent=1 // pred_check_branch
      %34 = sbr.rel (0) target = $region21
    $region20: #{transformer_forward.1} parent=1 // pred_region
      _
    $region21: #{transformer_forward.1} parent=1 // pred_fallthru
      _
    // Predicated region
    $region22: #{transformer_forward.1} parent=1 // pred_check
      _
    $region23: #{transformer_forward.1} parent=1 // pred_check_branch
      %36 = sbr.rel (0) target = $region25
    $region24: #{transformer_forward.1} parent=1 // pred_region
      _
    $region25: #{transformer_forward.1} parent=1 // pred_fallthru
      _
    // Predicated region
    $region26: #{transformer_forward.1} parent=1 // pred_check
      _
    $region27: #{transformer_forward.1} parent=1 // pred_check_branch
      %38 = sbr.rel (0) target = $region29
    $region28: #{transformer_forward.1} parent=1 // pred_region
      _
    $region29: #{transformer_forward.1} parent=1 // pred_fallthru
      _
    // Predicated region
    $region30: #{transformer_forward.1} parent=1 // pred_check
      _
    $region31: #{transformer_forward.1} parent=1 // pred_check_branch
      %40 = sbr.rel (0) target = $region33
    $region32: #{transformer_forward.1} parent=1 // pred_region
      _
    $region33: #{transformer_forward.1} parent=1 // pred_fallthru
      _
    // Predicated region
    $region34: #{transformer_forward.1} parent=1 // pred_check
      _
    $region35: #{transformer_forward.1} parent=1 // pred_check_branch
      %42 = sbr.rel (0) target = $region37
    $region36: #{transformer_forward.1} parent=1 // pred_region
      _
    $region37: #{transformer_forward.1} parent=1 // pred_fallthru
      _
    // Predicated region
    $region38: #{transformer_forward.1} parent=1 // pred_check
      _
    $region39: #{transformer_forward.1} parent=1 // pred_check_branch
      %44 = sbr.rel (0) target = $region41
    $region40: #{transformer_forward.1} parent=1 // pred_region
      _
    $region41: #{transformer_forward.1} parent=1 // pred_fallthru
      _
    // Predicated region
    $region42: #{transformer_forward.1} parent=1 // pred_check
      _
    $region43: #{transformer_forward.1} parent=1 // pred_check_branch
      %46 = sbr.rel (0) target = $region45
    $region44: #{transformer_forward.1} parent=1 // pred_region
      _
    $region45: #{transformer_forward.1} parent=1 // pred_fallthru
      _
    // Predicated region
    $region46: #{transformer_forward.1} parent=1 // pred_check
      _
    $region47: #{transformer_forward.1} parent=1 // pred_check_branch
      %48 = sbr.rel (0) target = $region49
    $region48: #{transformer_forward.1} parent=1 // pred_region
      _
    $region49: #{transformer_forward.1} parent=1 // pred_fallthru
      _
    // Predicated region
    $region50: #{transformer_forward.1} parent=1 // pred_check
      _
    $region51: #{transformer_forward.1} parent=1 // pred_check_branch
      %50 = sbr.rel (0) target = $region53
    $region52: #{transformer_forward.1} parent=1 // pred_region
      _
    $region53: #{transformer_forward.1} parent=1 // pred_fallthru
      _
    // Predicated region
    $region54: #{transformer_forward.1} parent=1 // pred_check
      _
    $region55: #{transformer_forward.1} parent=1 // pred_check_branch
      %52 = sbr.rel (0) target = $region57
    $region56: #{transformer_forward.1} parent=1 // pred_region
      _
    $region57: #{transformer_forward.1} parent=1 // pred_fallthru
      _
    // Predicated region
    $region58: #{transformer_forward.1} parent=1 // pred_check
      _
    $region59: #{transformer_forward.1} parent=1 // pred_check_branch
      %54 = sbr.rel (0) target = $region61
    $region60: #{transformer_forward.1} parent=1 // pred_region
      _
    $region61: #{transformer_forward.1} parent=1 // pred_fallthru
      _
    // Predicated region
    $region62: #{transformer_forward.1} parent=1 // pred_check
      _
    $region63: #{transformer_forward.1} parent=1 // pred_check_branch
      %56 = sbr.rel (0) target = $region65
    $region64: #{transformer_forward.1} parent=1 // pred_region
      _
    $region65: #{transformer_forward.1} parent=1 // pred_fallthru
      _
    // Predicated region
    $region66: #{transformer_forward.1} parent=1 // pred_check
      _
    $region67: #{transformer_forward.1} parent=1 // pred_check_branch
      %58 = sbr.rel (0) target = $region69
    $region68: #{transformer_forward.1} parent=1 // pred_region
      _
    $region69: #{transformer_forward.1} parent=1 // pred_fallthru
      _
    // Predicated region
    $region70: #{transformer_forward.1} parent=1 // pred_check
      _
    $region71: #{transformer_forward.1} parent=1 // pred_check_branch
      %60 = sbr.rel (0) target = $region73
    $region72: #{transformer_forward.1} parent=1 // pred_region
      _
    $region73: #{transformer_forward.1} parent=1 // pred_fallthru
      _
    // Predicated region
    $region74: #{transformer_forward.1} parent=1 // pred_check
      _
    $region75: #{transformer_forward.1} parent=1 // pred_check_branch
      %62 = sbr.rel (0) target = $region77
    $region76: #{transformer_forward.1} parent=1 // pred_region
      _
    $region77: #{transformer_forward.1} parent=1 // pred_fallthru
      _
    %v63 = vlaneseq
    %v64 = vand.u32 %v63, 127
    %v65 = vld [vmem:[%s0] sm:$0xff]
    %v66 = vld [vmem:[%s0 + $0x8] sm:$0xff]
    %67 = vset.pattern.permute.xlu0 0
    %68 = vperm.xlu0 %67, %v65
    %v69 = vpop.permute.xlu0 %68
    %70 = vset.pattern.permute.xlu0 0
    %71 = vperm.xlu0 %70, %v66
    %v72 = vpop.permute.xlu0 %71
    %vm73 = vcmp.eq.s32.totalorder %v64, %v69
    %vm74 = vcmp.eq.s32.totalorder %v64, %v72
    %v75 = vld [vmem:[%s1] sm:$0xff]
    %v76 = vld [vmem:[%s1 + $0x8] sm:$0xff]
    %77 = vset.pattern.permute.xlu0 0
    %78 = vperm.xlu0 %77, %v75
    %v79 = vpop.permute.xlu0 %78
    %80 = vset.pattern.permute.xlu0 0
    %81 = vperm.xlu0 %80, %v76
    %v82 = vpop.permute.xlu0 %81
    %vm83 = vcmp.eq.s32.totalorder %v64, %v79
    %vm84 = vcmp.eq.s32.totalorder %v64, %v82
    %vm85 = vmor %vm73, %vm83
    %vm86 = vmor %vm74, %vm84
    %v87 = vsel %vm85, 1, 0
    %v88 = vsel %vm86, 1, 0
    %v89 = vcvt.s32.f32 %v87
    %v90 = vcvt.s32.f32 %v88
    %v91 = vld [vmem:[%s2] sm:$0xff]
    %v92 = vld [vmem:[%s2 + $0x8] sm:$0xff]
    %v93 = vld [vmem:[%s2 + $0x10] sm:$0xff]
    %v94 = vld [vmem:[%s2 + $0x18] sm:$0xff]
    %v95 = vld [vmem:[%s2 + $0x20] sm:$0xff]
    %v96 = vld [vmem:[%s2 + $0x28] sm:$0xff]
    %v97 = vld [vmem:[%s2 + $0x30] sm:$0xff]
    %v98 = vld [vmem:[%s2 + $0x38] sm:$0xff]
    %v99 = vld [vmem:[%s2 + $0x40] sm:$0xff]
    %v100 = vld [vmem:[%s2 + $0x48] sm:$0xff]
    %vm101 = vcmask 654336
    %v103 = vsel %vm101, %v89, 0
    %v106 = vsel %vm101, %v90, 0
    %108 = vmatprep.subr.mxu0 0.0
    %109 = vmatpush1.msra.mxu0 %v91
    %110 = vmatprep.subr.mxu0 0.0
    %111 = vmatpush1.msra.mxu0 %v92
    %112 = vmatprep.subr.mxu0 0.0
    %113 = vmatpush1.msra.mxu0 %v93
    %114 = vmatprep.subr.mxu0 0.0
    %115 = vmatpush1.msra.mxu0 %v94
    %116 = vmatprep.subr.mxu0 0.0
    %117 = vmatpush1.msra.mxu0 %v95
    %118 = vmatprep.subr.mxu0 0.0
    %119 = vmatpush1.msra.mxu0 %v96
    %120 = vmatprep.subr.mxu0 0.0
    %121 = vmatpush1.msra.mxu0 %v97
    %122 = vmatprep.subr.mxu0 0.0
    %123 = vmatpush1.msra.mxu0 %v98
    %124 = vmatprep.subr.mxu0 0.0
    %125 = vmatpush1.msra.mxu0 %v99
    %126 = vmatprep.subr.mxu0 0.0
    %127 = vmatpush1.msra.mxu0 %v100
    %128 = vmatprep.subr.mxu0 0.0
    %129 = vmatpush1.msra.mxu0 0.0
    %130 = vmatprep.subr.mxu0 0.0
    %131 = vmatpush1.msra.mxu0 0.0
    %132 = vmatprep.subr.mxu0 0.0
    %133 = vmatpush1.msra.mxu0 0.0
    %134 = vmatprep.subr.mxu0 0.0
    %135 = vmatpush1.msra.mxu0 0.0
    %136 = vmatprep.subr.mxu0 0.0
    %137 = vmatpush1.msra.mxu0 0.0
    %138 = vmatprep.subr.mxu0 0.0
    %139 = vmatpush1.msra.mxu0 0.0
    %140 = vmatprep.subr.mxu0 0.0
    %141 = vmatpush1.msra.mxu0 0.0
    %142 = vmatprep.subr.mxu0 0.0
    %143 = vmatpush1.msra.mxu0 0.0
    %144 = vmatprep.subr.mxu0 0.0
    %145 = vmatpush1.msra.mxu0 0.0
    %146 = vmatprep.subr.mxu0 0.0
    %147 = vmatpush1.msra.mxu0 0.0
    %148 = vmatprep.subr.mxu0 0.0
    %149 = vmatpush1.msra.mxu0 0.0
    %150 = vmatprep.subr.mxu0 0.0
    %151 = vmatpush1.msra.mxu0 0.0
    %152 = vmatprep.subr.mxu0 0.0
    %153 = vmatpush1.msra.mxu0 0.0
    %154 = vmatprep.subr.mxu0 0.0
    %155 = vmatpush1.msra.mxu0 0.0
    %156 = vmatprep.subr.mxu0 0.0
    %157 = vmatpush1.msra.mxu0 0.0
    %158 = vmatprep.subr.mxu0 0.0
    %159 = vmatpush1.msra.mxu0 0.0
    %160 = vmatprep.subr.mxu0 0.0
    %161 = vmatpush1.msra.mxu0 0.0
    %162 = vmatprep.subr.mxu0 0.0
    %163 = vmatpush1.msra.mxu0 0.0
    %164 = vmatprep.subr.mxu0 0.0
    %165 = vmatpush1.msra.mxu0 0.0
    %166 = vmatprep.subr.mxu0 0.0
    %167 = vmatpush1.msra.mxu0 0.0
    %168 = vmatprep.subr.mxu0 0.0
    %169 = vmatpush1.msra.mxu0 0.0
    %170 = vmatprep.subr.mxu0 0.0
    %171 = vmatpush1.msra.mxu0 0.0
    %172 = vmatprep.mubr.f32.mxu0 0.0
    %173 = vmatmul.mubr.f32.gmra.mrb[0].mxu0 %v103
    %v174 = vpop.f32.mrb[0].mxu0
    %v175 = vadd.f32 0.0, %v174
    %v176 = vpop.f32.mrb[0].mxu0
    %177 = vmatprep.mubr.f32.mxu0 0.0
    %178 = vmatmul.mubr.f32.gmra.mrb[0].mxu0 %v106
    %v179 = vpop.f32.mrb[0].mxu0
    %v180 = vadd.f32 0.0, %v179
    %v181 = vpop.f32.mrb[0].mxu0
    %182 = vdwg.mxu0
    %v183 = vld [vmem:[%s3] sm:$0xff]
    %v184 = vld [vmem:[%s3 + $0x8] sm:$0xff]
    %v185 = vld [vmem:[%s3 + $0x10] sm:$0xff]
    %v186 = vld [vmem:[%s3 + $0x18] sm:$0xff]
    %v187 = vld [vmem:[%s5] sm:$0xff]
    %v188 = vld [vmem:[%s5 + $0x8] sm:$0xff]
    %v189 = vld [vmem:[%s5 + $0x10] sm:$0xff]
    %v190 = vld [vmem:[%s5 + $0x18] sm:$0xff]
    %v191 = vld [vmem:[%s6] sm:$0x1]
    %v193 = vlaneseq
    %v194 = vshrl.u32 %v193, 7
    %v195 = vsub.s32 0, %v194
    %v196 = vrot.slane %v191, %v195
    %vm198 = vcmask 261120
    %v200 = vsel %vm198, %v175, 0
    %v203 = vsel %vm198, %v180, 0
    %205 = vmatprep.subr.mxu0 0.0
    %206 = vmatpush1.msra.mxu0 %v187
    %207 = vmatprep.subr.mxu0 0.0
    %208 = vmatpush1.msra.mxu0 %v188
    %209 = vmatprep.subr.mxu0 0.0
    %210 = vmatpush1.msra.mxu0 %v189
    %211 = vmatprep.subr.mxu0 0.0
    %212 = vmatpush1.msra.mxu0 %v190
    %213 = vmatprep.subr.mxu0 0.0
    %214 = vmatpush1.msra.mxu0 0.0
    %215 = vmatprep.subr.mxu0 0.0
    %216 = vmatpush1.msra.mxu0 0.0
    %217 = vmatprep.subr.mxu0 0.0
    %218 = vmatpush1.msra.mxu0 0.0
    %219 = vmatprep.subr.mxu0 0.0
    %220 = vmatpush1.msra.mxu0 0.0
    %221 = vmatprep.subr.mxu0 0.0
    %222 = vmatpush1.msra.mxu0 0.0
    %223 = vmatprep.subr.mxu0 0.0
    %224 = vmatpush1.msra.mxu0 0.0
    %225 = vmatprep.subr.mxu0 0.0
    %226 = vmatpush1.msra.mxu0 0.0
    %227 = vmatprep.subr.mxu0 0.0
    %228 = vmatpush1.msra.mxu0 0.0
    %229 = vmatprep.subr.mxu0 0.0
    %230 = vmatpush1.msra.mxu0 0.0
    %231 = vmatprep.subr.mxu0 0.0
    %232 = vmatpush1.msra.mxu0 0.0
    %233 = vmatprep.subr.mxu0 0.0
    %234 = vmatpush1.msra.mxu0 0.0
    %235 = vmatprep.subr.mxu0 0.0
    %236 = vmatpush1.msra.mxu0 0.0
    %237 = vmatprep.subr.mxu0 0.0
    %238 = vmatpush1.msra.mxu0 0.0
    %239 = vmatprep.subr.mxu0 0.0
    %240 = vmatpush1.msra.mxu0 0.0
    %241 = vmatprep.subr.mxu0 0.0
    %242 = vmatpush1.msra.mxu0 0.0
    %243 = vmatprep.subr.mxu0 0.0
    %244 = vmatpush1.msra.mxu0 0.0
    %245 = vmatprep.subr.mxu0 0.0
    %246 = vmatpush1.msra.mxu0 0.0
    %247 = vmatprep.subr.mxu0 0.0
    %248 = vmatpush1.msra.mxu0 0.0
    %249 = vmatprep.subr.mxu0 0.0
    %250 = vmatpush1.msra.mxu0 0.0
    %251 = vmatprep.subr.mxu0 0.0
    %252 = vmatpush1.msra.mxu0 0.0
    %253 = vmatprep.subr.mxu0 0.0
    %254 = vmatpush1.msra.mxu0 0.0
    %255 = vmatprep.subr.mxu0 0.0
    %256 = vmatpush1.msra.mxu0 0.0
    %257 = vmatprep.subr.mxu0 0.0
    %258 = vmatpush1.msra.mxu0 0.0
    %259 = vmatprep.subr.mxu0 0.0
    %260 = vmatpush1.msra.mxu0 0.0
    %261 = vmatprep.subr.mxu0 0.0
    %262 = vmatpush1.msra.mxu0 0.0
    %263 = vmatprep.subr.mxu0 0.0
    %264 = vmatpush1.msra.mxu0 0.0
    %265 = vmatprep.subr.mxu0 0.0
    %266 = vmatpush1.msra.mxu0 0.0
    %267 = vmatprep.subr.mxu0 0.0
    %268 = vmatpush1.msra.mxu0 0.0
    %269 = vmatprep.mubr.f32.mxu0 0.0
    %270 = vmatmul.mubr.f32.gmra.mrb[0].mxu0 %v200
    %v271 = vpop.f32.mrb[0].mxu0
    %v272 = vadd.f32 %v196, %v271
    %v273 = vpop.f32.mrb[0].mxu0
    %274 = vmatprep.mubr.f32.mxu0 0.0
    %275 = vmatmul.mubr.f32.gmra.mrb[0].mxu0 %v203
    %v276 = vpop.f32.mrb[0].mxu0
    %v277 = vadd.f32 %v196, %v276
    %v278 = vpop.f32.mrb[0].mxu0
    %279 = vdwg.mxu0
    %v280 = vld [vmem:[%s4] sm:$0xff]
    %v281 = vld [vmem:[%s4 + $0x8] sm:$0xff]
    %284 = vrot.lane.b32.xlu0 %v272, 96
    %v285 = vpop.permute.xlu0 %284
    %286 = vrot.lane.b32.xlu0 %v277, 96
    %v287 = vpop.permute.xlu0 %286
    %vm290 = vcmask 130048
    %v292 = vsel %vm290, %v280, 0
    %v295 = vsel %vm290, %v281, 0
    %297 = vmatprep.subr.mxu0 0.0
    %298 = vmatpush1.msra.mxu0 %v285
    %299 = vmatprep.subr.mxu0 0.0
    %300 = vmatpush1.msra.mxu0 %v287
    %301 = vmatprep.subr.mxu0 0.0
    %302 = vmatpush1.msra.mxu0 0.0
    %303 = vmatprep.subr.mxu0 0.0
    %304 = vmatpush1.msra.mxu0 0.0
    %305 = vmatprep.subr.mxu0 0.0
    %306 = vmatpush1.msra.mxu0 0.0
    %307 = vmatprep.subr.mxu0 0.0
    %308 = vmatpush1.msra.mxu0 0.0
    %309 = vmatprep.subr.mxu0 0.0
    %310 = vmatpush1.msra.mxu0 0.0
    %311 = vmatprep.subr.mxu0 0.0
    %312 = vmatpush1.msra.mxu0 0.0
    %313 = vmatprep.subr.mxu0 0.0
    %314 = vmatpush1.msra.mxu0 0.0
    %315 = vmatprep.subr.mxu0 0.0
    %316 = vmatpush1.msra.mxu0 0.0
    %317 = vmatprep.subr.mxu0 0.0
    %318 = vmatpush1.msra.mxu0 0.0
    %319 = vmatprep.subr.mxu0 0.0
    %320 = vmatpush1.msra.mxu0 0.0
    %321 = vmatprep.subr.mxu0 0.0
    %322 = vmatpush1.msra.mxu0 0.0
    %323 = vmatprep.subr.mxu0 0.0
    %324 = vmatpush1.msra.mxu0 0.0
    %325 = vmatprep.subr.mxu0 0.0
    %326 = vmatpush1.msra.mxu0 0.0
    %327 = vmatprep.subr.mxu0 0.0
    %328 = vmatpush1.msra.mxu0 0.0
    %329 = vmatprep.subr.mxu0 0.0
    %330 = vmatpush1.msra.mxu0 0.0
    %331 = vmatprep.subr.mxu0 0.0
    %332 = vmatpush1.msra.mxu0 0.0
    %333 = vmatprep.subr.mxu0 0.0
    %334 = vmatpush1.msra.mxu0 0.0
    %335 = vmatprep.subr.mxu0 0.0
    %336 = vmatpush1.msra.mxu0 0.0
    %337 = vmatprep.subr.mxu0 0.0
    %338 = vmatpush1.msra.mxu0 0.0
    %339 = vmatprep.subr.mxu0 0.0
    %340 = vmatpush1.msra.mxu0 0.0
    %341 = vmatprep.subr.mxu0 0.0
    %342 = vmatpush1.msra.mxu0 0.0
    %343 = vmatprep.subr.mxu0 0.0
    %344 = vmatpush1.msra.mxu0 0.0
    %345 = vmatprep.subr.mxu0 0.0
    %346 = vmatpush1.msra.mxu0 0.0
    %347 = vmatprep.subr.mxu0 0.0
    %348 = vmatpush1.msra.mxu0 0.0
    %349 = vmatprep.subr.mxu0 0.0
    %350 = vmatpush1.msra.mxu0 0.0
    %351 = vmatprep.subr.mxu0 0.0
    %352 = vmatpush1.msra.mxu0 0.0
    %353 = vmatprep.subr.mxu0 0.0
    %354 = vmatpush1.msra.mxu0 0.0
    %355 = vmatprep.subr.mxu0 0.0
    %356 = vmatpush1.msra.mxu0 0.0
    %357 = vmatprep.subr.mxu0 0.0
    %358 = vmatpush1.msra.mxu0 0.0
    %359 = vmatprep.subr.mxu0 0.0
    %360 = vmatpush1.msra.mxu0 0.0
    %361 = vmatprep.mubr.f32.mxu0 0.0
    %362 = vmatmul.mubr.f32.gmra.mrb[0].mxu0 %v292
    %v363 = vpop.f32.mrb[0].mxu0
    %v364 = vadd.f32 0.0, %v363
    %v365 = vpop.f32.mrb[0].mxu0
    %366 = vmatprep.mubr.f32.mxu0 0.0
    %367 = vmatmul.mubr.f32.gmra.mrb[0].mxu0 %v295
    %v368 = vpop.f32.mrb[0].mxu0
    %v369 = vadd.f32 0.0, %v368
    %v370 = vpop.f32.mrb[0].mxu0
    %371 = vdwg.mxu0
    %372 = vrot.lane.b32.xlu0 %v272, 64
    %v373 = vpop.permute.xlu0 %372
    %374 = vrot.lane.b32.xlu0 %v277, 64
    %v375 = vpop.permute.xlu0 %374
    %378 = vmatprep.subr.mxu0 0.0
    %379 = vmatpush1.msra.mxu0 %v373
    %380 = vmatprep.subr.mxu0 0.0
    %381 = vmatpush1.msra.mxu0 %v375
    %382 = vmatprep.subr.mxu0 0.0
    %383 = vmatpush1.msra.mxu0 0.0
    %384 = vmatprep.subr.mxu0 0.0
    %385 = vmatpush1.msra.mxu0 0.0
    %386 = vmatprep.subr.mxu0 0.0
    %387 = vmatpush1.msra.mxu0 0.0
    %388 = vmatprep.subr.mxu0 0.0
    %389 = vmatpush1.msra.mxu0 0.0
    %390 = vmatprep.subr.mxu0 0.0
    %391 = vmatpush1.msra.mxu0 0.0
    %392 = vmatprep.subr.mxu0 0.0
    %393 = vmatpush1.msra.mxu0 0.0
    %394 = vmatprep.subr.mxu0 0.0
    %395 = vmatpush1.msra.mxu0 0.0
    %396 = vmatprep.subr.mxu0 0.0
    %397 = vmatpush1.msra.mxu0 0.0
    %398 = vmatprep.subr.mxu0 0.0
    %399 = vmatpush1.msra.mxu0 0.0
    %400 = vmatprep.subr.mxu0 0.0
    %401 = vmatpush1.msra.mxu0 0.0
    %402 = vmatprep.subr.mxu0 0.0
    %403 = vmatpush1.msra.mxu0 0.0
    %404 = vmatprep.subr.mxu0 0.0
    %405 = vmatpush1.msra.mxu0 0.0
    %406 = vmatprep.subr.mxu0 0.0
    %407 = vmatpush1.msra.mxu0 0.0
    %408 = vmatprep.subr.mxu0 0.0
    %409 = vmatpush1.msra.mxu0 0.0
    %410 = vmatprep.subr.mxu0 0.0
    %411 = vmatpush1.msra.mxu0 0.0
    %412 = vmatprep.subr.mxu0 0.0
    %413 = vmatpush1.msra.mxu0 0.0
    %414 = vmatprep.subr.mxu0 0.0
    %415 = vmatpush1.msra.mxu0 0.0
    %416 = vmatprep.subr.mxu0 0.0
    %417 = vmatpush1.msra.mxu0 0.0
    %418 = vmatprep.subr.mxu0 0.0
    %419 = vmatpush1.msra.mxu0 0.0
    %420 = vmatprep.subr.mxu0 0.0
    %421 = vmatpush1.msra.mxu0 0.0
    %422 = vmatprep.subr.mxu0 0.0
    %423 = vmatpush1.msra.mxu0 0.0
    %424 = vmatprep.subr.mxu0 0.0
    %425 = vmatpush1.msra.mxu0 0.0
    %426 = vmatprep.subr.mxu0 0.0
    %427 = vmatpush1.msra.mxu0 0.0
    %428 = vmatprep.subr.mxu0 0.0
    %429 = vmatpush1.msra.mxu0 0.0
    %430 = vmatprep.subr.mxu0 0.0
    %431 = vmatpush1.msra.mxu0 0.0
    %432 = vmatprep.subr.mxu0 0.0
    %433 = vmatpush1.msra.mxu0 0.0
    %434 = vmatprep.subr.mxu0 0.0
    %435 = vmatpush1.msra.mxu0 0.0
    %436 = vmatprep.subr.mxu0 0.0
    %437 = vmatpush1.msra.mxu0 0.0
    %438 = vmatprep.subr.mxu0 0.0
    %439 = vmatpush1.msra.mxu0 0.0
    %440 = vmatprep.subr.mxu0 0.0
    %441 = vmatpush1.msra.mxu0 0.0
    %442 = vmatprep.mubr.f32.mxu0 0.0
    %443 = vmatmul.mubr.f32.gmra.mrb[0].mxu0 %v292
    %v444 = vpop.f32.mrb[0].mxu0
    %v445 = vadd.f32 0.0, %v444
    %v446 = vpop.f32.mrb[0].mxu0
    %447 = vmatprep.mubr.f32.mxu0 0.0
    %448 = vmatmul.mubr.f32.gmra.mrb[0].mxu0 %v295
    %v449 = vpop.f32.mrb[0].mxu0
    %v450 = vadd.f32 0.0, %v449
    %v451 = vpop.f32.mrb[0].mxu0
    %452 = vdwg.mxu0
    %v453 = vmul.f32 %v272, %v285
    %v454 = vmul.f32 %v277, %v287
    %v456 = vsel %vm198, %v453, 0
    %v459 = vsel %vm198, %v454, 0
    %461 = vmatprep.subr.mxu0 0.0
    %462 = vmatpush1.msra.mxu0 %v183
    %463 = vmatprep.subr.mxu0 0.0
    %464 = vmatpush1.msra.mxu0 %v184
    %465 = vmatprep.subr.mxu0 0.0
    %466 = vmatpush1.msra.mxu0 %v185
    %467 = vmatprep.subr.mxu0 0.0
    %468 = vmatpush1.msra.mxu0 %v186
    %469 = vmatprep.subr.mxu0 0.0
    %470 = vmatpush1.msra.mxu0 0.0
    %471 = vmatprep.subr.mxu0 0.0
    %472 = vmatpush1.msra.mxu0 0.0
    %473 = vmatprep.subr.mxu0 0.0
    %474 = vmatpush1.msra.mxu0 0.0
    %475 = vmatprep.subr.mxu0 0.0
    %476 = vmatpush1.msra.mxu0 0.0
    %477 = vmatprep.subr.mxu0 0.0
    %478 = vmatpush1.msra.mxu0 0.0
    %479 = vmatprep.subr.mxu0 0.0
    %480 = vmatpush1.msra.mxu0 0.0
    %481 = vmatprep.subr.mxu0 0.0
    %482 = vmatpush1.msra.mxu0 0.0
    %483 = vmatprep.subr.mxu0 0.0
    %484 = vmatpush1.msra.mxu0 0.0
    %485 = vmatprep.subr.mxu0 0.0
    %486 = vmatpush1.msra.mxu0 0.0
    %487 = vmatprep.subr.mxu0 0.0
    %488 = vmatpush1.msra.mxu0 0.0
    %489 = vmatprep.subr.mxu0 0.0
    %490 = vmatpush1.msra.mxu0 0.0
    %491 = vmatprep.subr.mxu0 0.0
    %492 = vmatpush1.msra.mxu0 0.0
    %493 = vmatprep.subr.mxu0 0.0
    %494 = vmatpush1.msra.mxu0 0.0
    %495 = vmatprep.subr.mxu0 0.0
    %496 = vmatpush1.msra.mxu0 0.0
    %497 = vmatprep.subr.mxu0 0.0
    %498 = vmatpush1.msra.mxu0 0.0
    %499 = vmatprep.subr.mxu0 0.0
    %500 = vmatpush1.msra.mxu0 0.0
    %501 = vmatprep.subr.mxu0 0.0
    %502 = vmatpush1.msra.mxu0 0.0
    %503 = vmatprep.subr.mxu0 0.0
    %504 = vmatpush1.msra.mxu0 0.0
    %505 = vmatprep.subr.mxu0 0.0
    %506 = vmatpush1.msra.mxu0 0.0
    %507 = vmatprep.subr.mxu0 0.0
    %508 = vmatpush1.msra.mxu0 0.0
    %509 = vmatprep.subr.mxu0 0.0
    %510 = vmatpush1.msra.mxu0 0.0
    %511 = vmatprep.subr.mxu0 0.0
    %512 = vmatpush1.msra.mxu0 0.0
    %513 = vmatprep.subr.mxu0 0.0
    %514 = vmatpush1.msra.mxu0 0.0
    %515 = vmatprep.subr.mxu0 0.0
    %516 = vmatpush1.msra.mxu0 0.0
    %517 = vmatprep.subr.mxu0 0.0
    %518 = vmatpush1.msra.mxu0 0.0
    %519 = vmatprep.subr.mxu0 0.0
    %520 = vmatpush1.msra.mxu0 0.0
    %521 = vmatprep.subr.mxu0 0.0
    %522 = vmatpush1.msra.mxu0 0.0
    %523 = vmatprep.subr.mxu0 0.0
    %524 = vmatpush1.msra.mxu0 0.0
    %525 = vmatprep.mubr.f32.mxu0 0.0
    %526 = vmatmul.mubr.f32.gmra.mrb[0].mxu0 %v456
    %v527 = vpop.f32.mrb[0].mxu0
    %v528 = vadd.f32 0.0, %v527
    %v529 = vpop.f32.mrb[0].mxu0
    %530 = vmatprep.mubr.f32.mxu0 0.0
    %531 = vmatmul.mubr.f32.gmra.mrb[0].mxu0 %v459
    %v532 = vpop.f32.mrb[0].mxu0
    %v533 = vadd.f32 0.0, %v532
    %v534 = vpop.f32.mrb[0].mxu0
    %535 = vdwg.mxu0
    %v536 = vmul.f32 %v272, %v364
    %v537 = vmul.f32 %v277, %v369
    %v539 = vsel %vm198, %v536, 0
    %v542 = vsel %vm198, %v537, 0
    %544 = vmatprep.subr.mxu0 0.0
    %545 = vmatpush1.msra.mxu0 %v183
    %546 = vmatprep.subr.mxu0 0.0
    %547 = vmatpush1.msra.mxu0 %v184
    %548 = vmatprep.subr.mxu0 0.0
    %549 = vmatpush1.msra.mxu0 %v185
    %550 = vmatprep.subr.mxu0 0.0
    %551 = vmatpush1.msra.mxu0 %v186
    %552 = vmatprep.subr.mxu0 0.0
    %553 = vmatpush1.msra.mxu0 0.0
    %554 = vmatprep.subr.mxu0 0.0
    %555 = vmatpush1.msra.mxu0 0.0
    %556 = vmatprep.subr.mxu0 0.0
    %557 = vmatpush1.msra.mxu0 0.0
    %558 = vmatprep.subr.mxu0 0.0
    %559 = vmatpush1.msra.mxu0 0.0
    %560 = vmatprep.subr.mxu0 0.0
    %561 = vmatpush1.msra.mxu0 0.0
    %562 = vmatprep.subr.mxu0 0.0
    %563 = vmatpush1.msra.mxu0 0.0
    %564 = vmatprep.subr.mxu0 0.0
    %565 = vmatpush1.msra.mxu0 0.0
    %566 = vmatprep.subr.mxu0 0.0
    %567 = vmatpush1.msra.mxu0 0.0
    %568 = vmatprep.subr.mxu0 0.0
    %569 = vmatpush1.msra.mxu0 0.0
    %570 = vmatprep.subr.mxu0 0.0
    %571 = vmatpush1.msra.mxu0 0.0
    %572 = vmatprep.subr.mxu0 0.0
    %573 = vmatpush1.msra.mxu0 0.0
    %574 = vmatprep.subr.mxu0 0.0
    %575 = vmatpush1.msra.mxu0 0.0
    %576 = vmatprep.subr.mxu0 0.0
    %577 = vmatpush1.msra.mxu0 0.0
    %578 = vmatprep.subr.mxu0 0.0
    %579 = vmatpush1.msra.mxu0 0.0
    %580 = vmatprep.subr.mxu0 0.0
    %581 = vmatpush1.msra.mxu0 0.0
    %582 = vmatprep.subr.mxu0 0.0
    %583 = vmatpush1.msra.mxu0 0.0
    %584 = vmatprep.subr.mxu0 0.0
    %585 = vmatpush1.msra.mxu0 0.0
    %586 = vmatprep.subr.mxu0 0.0
    %587 = vmatpush1.msra.mxu0 0.0
    %588 = vmatprep.subr.mxu0 0.0
    %589 = vmatpush1.msra.mxu0 0.0
    %590 = vmatprep.subr.mxu0 0.0
    %591 = vmatpush1.msra.mxu0 0.0
    %592 = vmatprep.subr.mxu0 0.0
    %593 = vmatpush1.msra.mxu0 0.0
    %594 = vmatprep.subr.mxu0 0.0
    %595 = vmatpush1.msra.mxu0 0.0
    %596 = vmatprep.subr.mxu0 0.0
    %597 = vmatpush1.msra.mxu0 0.0
    %598 = vmatprep.subr.mxu0 0.0
    %599 = vmatpush1.msra.mxu0 0.0
    %600 = vmatprep.subr.mxu0 0.0
    %601 = vmatpush1.msra.mxu0 0.0
    %602 = vmatprep.subr.mxu0 0.0
    %603 = vmatpush1.msra.mxu0 0.0
    %604 = vmatprep.subr.mxu0 0.0
    %605 = vmatpush1.msra.mxu0 0.0
    %606 = vmatprep.subr.mxu0 0.0
    %607 = vmatpush1.msra.mxu0 0.0
    %608 = vmatprep.mubr.f32.mxu0 0.0
    %609 = vmatmul.mubr.f32.gmra.mrb[0].mxu0 %v539
    %v610 = vpop.f32.mrb[0].mxu0
    %v611 = vadd.f32 0.0, %v610
    %v612 = vpop.f32.mrb[0].mxu0
    %613 = vmatprep.mubr.f32.mxu0 0.0
    %614 = vmatmul.mubr.f32.gmra.mrb[0].mxu0 %v542
    %v615 = vpop.f32.mrb[0].mxu0
    %v616 = vadd.f32 0.0, %v615
    %v617 = vpop.f32.mrb[0].mxu0
    %618 = vdwg.mxu0
    %v619 = vmax.f32 %v528, %v611
    %v620 = vmax.f32 %v533, %v616
    %v621 = vsub.f32 %v528, %v619
    %v622 = vsub.f32 %v533, %v620
    %v623 = vmul.f32 %v621, 1.442695
    %v624 = vpow.pop %v623
    %v625 = vmul.f32 %v622, 1.442695
    %v626 = vpow.pop %v625
    %v627 = vsub.f32 %v611, %v619
    %v628 = vsub.f32 %v616, %v620
    %v629 = vmul.f32 %v627, 1.442695
    %v630 = vpow.pop %v629
    %v631 = vmul.f32 %v628, 1.442695
    %v632 = vpow.pop %v631
    %v633 = vadd.f32 %v624, %v630
    %v634 = vadd.f32 %v626, %v632
    %v635 = vrcp.pop %v633
    %v636 = vrcp.pop %v634
    %v637 = vmul.f32 %v624, %v373
    %v638 = vmul.f32 %v626, %v375
    %v639 = vmul.f32 %v630, %v445
    %v640 = vmul.f32 %v632, %v450
    %v641 = vadd.f32 %v637, %v639
    %v642 = vadd.f32 %v638, %v640
    %v643 = vmul.f32 %v641, %v635
    %v644 = vmul.f32 %v642, %v636
    %v645 = vld [vmem:[%s7] sm:$0xff]
    %v646 = vld [vmem:[%s7 + $0x8] sm:$0xff]
    %v647 = vld [vmem:[%s7 + $0x10] sm:$0xff]
    %v648 = vld [vmem:[%s7 + $0x18] sm:$0xff]
    %v649 = vld [vmem:[%s8] sm:$0x1]
    %v651 = vlaneseq
    %v652 = vshrl.u32 %v651, 7
    %v653 = vsub.s32 0, %v652
    %v654 = vrot.slane %v649, %v653
    %v657 = vsel %vm198, %v643, 0
    %v660 = vsel %vm198, %v644, 0
    %662 = vmatprep.subr.mxu0 0.0
    %663 = vmatpush1.msra.mxu0 %v645
    %664 = vmatprep.subr.mxu0 0.0
    %665 = vmatpush1.msra.mxu0 %v646
    %666 = vmatprep.subr.mxu0 0.0
    %667 = vmatpush1.msra.mxu0 %v647
    %668 = vmatprep.subr.mxu0 0.0
    %669 = vmatpush1.msra.mxu0 %v648
    %670 = vmatprep.subr.mxu0 0.0
    %671 = vmatpush1.msra.mxu0 0.0
    %672 = vmatprep.subr.mxu0 0.0
    %673 = vmatpush1.msra.mxu0 0.0
    %674 = vmatprep.subr.mxu0 0.0
    %675 = vmatpush1.msra.mxu0 0.0
    %676 = vmatprep.subr.mxu0 0.0
    %677 = vmatpush1.msra.mxu0 0.0
    %678 = vmatprep.subr.mxu0 0.0
    %679 = vmatpush1.msra.mxu0 0.0
    %680 = vmatprep.subr.mxu0 0.0
    %681 = vmatpush1.msra.mxu0 0.0
    %682 = vmatprep.subr.mxu0 0.0
    %683 = vmatpush1.msra.mxu0 0.0
    %684 = vmatprep.subr.mxu0 0.0
    %685 = vmatpush1.msra.mxu0 0.0
    %686 = vmatprep.subr.mxu0 0.0
    %687 = vmatpush1.msra.mxu0 0.0
    %688 = vmatprep.subr.mxu0 0.0
    %689 = vmatpush1.msra.mxu0 0.0
    %690 = vmatprep.subr.mxu0 0.0
    %691 = vmatpush1.msra.mxu0 0.0
    %692 = vmatprep.subr.mxu0 0.0
    %693 = vmatpush1.msra.mxu0 0.0
    %694 = vmatprep.subr.mxu0 0.0
    %695 = vmatpush1.msra.mxu0 0.0
    %696 = vmatprep.subr.mxu0 0.0
    %697 = vmatpush1.msra.mxu0 0.0
    %698 = vmatprep.subr.mxu0 0.0
    %699 = vmatpush1.msra.mxu0 0.0
    %700 = vmatprep.subr.mxu0 0.0
    %701 = vmatpush1.msra.mxu0 0.0
    %702 = vmatprep.subr.mxu0 0.0
    %703 = vmatpush1.msra.mxu0 0.0
    %704 = vmatprep.subr.mxu0 0.0
    %705 = vmatpush1.msra.mxu0 0.0
    %706 = vmatprep.subr.mxu0 0.0
    %707 = vmatpush1.msra.mxu0 0.0
    %708 = vmatprep.subr.mxu0 0.0
    %709 = vmatpush1.msra.mxu0 0.0
    %710 = vmatprep.subr.mxu0 0.0
    %711 = vmatpush1.msra.mxu0 0.0
    %712 = vmatprep.subr.mxu0 0.0
    %713 = vmatpush1.msra.mxu0 0.0
    %714 = vmatprep.subr.mxu0 0.0
    %715 = vmatpush1.msra.mxu0 0.0
    %716 = vmatprep.subr.mxu0 0.0
    %717 = vmatpush1.msra.mxu0 0.0
    %718 = vmatprep.subr.mxu0 0.0
    %719 = vmatpush1.msra.mxu0 0.0
    %720 = vmatprep.subr.mxu0 0.0
    %721 = vmatpush1.msra.mxu0 0.0
    %722 = vmatprep.subr.mxu0 0.0
    %723 = vmatpush1.msra.mxu0 0.0
    %724 = vmatprep.subr.mxu0 0.0
    %725 = vmatpush1.msra.mxu0 0.0
    %726 = vmatprep.mubr.f32.mxu0 0.0
    %727 = vmatmul.mubr.f32.gmra.mrb[0].mxu0 %v657
    %v728 = vpop.f32.mrb[0].mxu0
    %v729 = vadd.f32 %v654, %v728
    %v730 = vpop.f32.mrb[0].mxu0
    %731 = vmatprep.mubr.f32.mxu0 0.0
    %732 = vmatmul.mubr.f32.gmra.mrb[0].mxu0 %v660
    %v733 = vpop.f32.mrb[0].mxu0
    %v734 = vadd.f32 %v654, %v733
    %v735 = vpop.f32.mrb[0].mxu0
    %736 = vdwg.mxu0
    %v737 = vadd.f32 %v175, %v729
    %v738 = vadd.f32 %v180, %v734
    %v739 = vld [vmem:[%s9] sm:$0x1]
    %v740 = vld [vmem:[%s10] sm:$0x1]
    %v741 = vsel %vm198, %v737, 0.0
    %742 = vadd.xlane.f32.xlu0 %v741
    %v743 = vpop.xlane.xlu0 %742
    %v744 = vsel %vm198, %v738, 0.0
    %745 = vadd.xlane.f32.xlu0 %v744
    %v746 = vpop.xlane.xlu0 %745
    %v747 = vrcp.pop 32.0
    %v748 = vmul.f32 %v743, %v747
    %v749 = vmul.f32 %v746, %v747
    %v750 = vsub.f32 %v737, %v748
    %v751 = vsub.f32 %v738, %v749
    %v752 = vmul.f32 %v750, %v750
    %v753 = vmul.f32 %v751, %v751
    %v754 = vsel %vm198, %v752, 0.0
    %755 = vadd.xlane.f32.xlu0 %v754
    %v756 = vpop.xlane.xlu0 %755
    %v757 = vsel %vm198, %v753, 0.0
    %758 = vadd.xlane.f32.xlu0 %v757
    %v759 = vpop.xlane.xlu0 %758
    %v760 = vmul.f32 %v756, %v747
    %v761 = vmul.f32 %v759, %v747
    %v762 = vadd.f32 %v760, 1e-05
    %v763 = vadd.f32 %v761, 1e-05
    %v764 = vrsqrt.pop %v762
    %v765 = vrsqrt.pop %v763
    %v766 = vmul.f32 %v750, %v764
    %v767 = vmul.f32 %v751, %v765
    %v769 = vlaneseq
    %v770 = vshrl.u32 %v769, 7
    %v771 = vsub.s32 0, %v770
    %v772 = vrot.slane %v739, %v771
    %v774 = vmul.f32 %v766, %v772
    %v775 = vmul.f32 %v767, %v772
    %v777 = vlaneseq
    %v778 = vshrl.u32 %v777, 7
    %v779 = vsub.s32 0, %v778
    %v780 = vrot.slane %v740, %v779
    %v782 = vadd.f32 %v774, %v780
    %v783 = vadd.f32 %v775, %v780
    %v784 = vld [vmem:[%s11] sm:$0xff]
    %v785 = vld [vmem:[%s11 + $0x8] sm:$0xff]
    %v786 = vld [vmem:[%s11 + $0x10] sm:$0xff]
    %v787 = vld [vmem:[%s11 + $0x18] sm:$0xff]
    %v788 = vld [vmem:[%s12] sm:$0x1]
    %v790 = vlaneseq
    %v791 = vshrl.u32 %v790, 7
    %v792 = vsub.s32 0, %v791
    %v793 = vrot.slane %v788, %v792
    %v796 = vsel %vm198, %v782, 0
    %v799 = vsel %vm198, %v783, 0
    %801 = vmatprep.subr.mxu0 0.0
    %802 = vmatpush1.msra.mxu0 %v784
    %803 = vmatprep.subr.mxu0 0.0
    %804 = vmatpush1.msra.mxu0 %v785
    %805 = vmatprep.subr.mxu0 0.0
    %806 = vmatpush1.msra.mxu0 %v786
    %807 = vmatprep.subr.mxu0 0.0
    %808 = vmatpush1.msra.mxu0 %v787
    %809 = vmatprep.subr.mxu0 0.0
    %810 = vmatpush1.msra.mxu0 0.0
    %811 = vmatprep.subr.mxu0 0.0
    %812 = vmatpush1.msra.mxu0 0.0
    %813 = vmatprep.subr.mxu0 0.0
    %814 = vmatpush1.msra.mxu0 0.0
    %815 = vmatprep.subr.mxu0 0.0
    %816 = vmatpush1.msra.mxu0 0.0
    %817 = vmatprep.subr.mxu0 0.0
    %818 = vmatpush1.msra.mxu0 0.0
    %819 = vmatprep.subr.mxu0 0.0
    %820 = vmatpush1.msra.mxu0 0.0
    %821 = vmatprep.subr.mxu0 0.0
    %822 = vmatpush1.msra.mxu0 0.0
    %823 = vmatprep.subr.mxu0 0.0
    %824 = vmatpush1.msra.mxu0 0.0
    %825 = vmatprep.subr.mxu0 0.0
    %826 = vmatpush1.msra.mxu0 0.0
    %827 = vmatprep.subr.mxu0 0.0
    %828 = vmatpush1.msra.mxu0 0.0
    %829 = vmatprep.subr.mxu0 0.0
    %830 = vmatpush1.msra.mxu0 0.0
    %831 = vmatprep.subr.mxu0 0.0
    %832 = vmatpush1.msra.mxu0 0.0
    %833 = vmatprep.subr.mxu0 0.0
    %834 = vmatpush1.msra.mxu0 0.0
    %835 = vmatprep.subr.mxu0 0.0
    %836 = vmatpush1.msra.mxu0 0.0
    %837 = vmatprep.subr.mxu0 0.0
    %838 = vmatpush1.msra.mxu0 0.0
    %839 = vmatprep.subr.mxu0 0.0
    %840 = vmatpush1.msra.mxu0 0.0
    %841 = vmatprep.subr.mxu0 0.0
    %842 = vmatpush1.msra.mxu0 0.0
    %843 = vmatprep.subr.mxu0 0.0
    %844 = vmatpush1.msra.mxu0 0.0
    %845 = vmatprep.subr.mxu0 0.0
    %846 = vmatpush1.msra.mxu0 0.0
    %847 = vmatprep.subr.mxu0 0.0
    %848 = vmatpush1.msra.mxu0 0.0
    %849 = vmatprep.subr.mxu0 0.0
    %850 = vmatpush1.msra.mxu0 0.0
    %851 = vmatprep.subr.mxu0 0.0
    %852 = vmatpush1.msra.mxu0 0.0
    %853 = vmatprep.subr.mxu0 0.0
    %854 = vmatpush1.msra.mxu0 0.0
    %855 = vmatprep.subr.mxu0 0.0
    %856 = vmatpush1.msra.mxu0 0.0
    %857 = vmatprep.subr.mxu0 0.0
    %858 = vmatpush1.msra.mxu0 0.0
    %859 = vmatprep.subr.mxu0 0.0
    %860 = vmatpush1.msra.mxu0 0.0
    %861 = vmatprep.subr.mxu0 0.0
    %862 = vmatpush1.msra.mxu0 0.0
    %863 = vmatprep.subr.mxu0 0.0
    %864 = vmatpush1.msra.mxu0 0.0
    %865 = vmatprep.mubr.f32.mxu0 0.0
    %866 = vmatmul.mubr.f32.gmra.mrb[0].mxu0 %v796
    %v867 = vpop.f32.mrb[0].mxu0
    %v868 = vadd.f32 %v793, %v867
    %v869 = vpop.f32.mrb[0].mxu0
    %870 = vmatprep.mubr.f32.mxu0 0.0
    %871 = vmatmul.mubr.f32.gmra.mrb[0].mxu0 %v799
    %v872 = vpop.f32.mrb[0].mxu0
    %v873 = vadd.f32 %v793, %v872
    %v874 = vpop.f32.mrb[0].mxu0
    %875 = vdwg.mxu0
    %v876 = vmax.f32 %v868, 0.0
    %v877 = vmax.f32 %v873, 0.0
    %v878 = vld [vmem:[%s13] sm:$0xff]
    %v879 = vld [vmem:[%s13 + $0x8] sm:$0xff]
    %v880 = vld [vmem:[%s13 + $0x10] sm:$0xff]
    %v881 = vld [vmem:[%s13 + $0x18] sm:$0xff]
    %v882 = vld [vmem:[%s14] sm:$0x1]
    %v884 = vlaneseq
    %v885 = vshrl.u32 %v884, 7
    %v886 = vsub.s32 0, %v885
    %v887 = vrot.slane %v882, %v886
    %v890 = vsel %vm198, %v876, 0
    %v893 = vsel %vm198, %v877, 0
    %895 = vmatprep.subr.mxu0 0.0
    %896 = vmatpush1.msra.mxu0 %v878
    %897 = vmatprep.subr.mxu0 0.0
    %898 = vmatpush1.msra.mxu0 %v879
    %899 = vmatprep.subr.mxu0 0.0
    %900 = vmatpush1.msra.mxu0 %v880
    %901 = vmatprep.subr.mxu0 0.0
    %902 = vmatpush1.msra.mxu0 %v881
    %903 = vmatprep.subr.mxu0 0.0
    %904 = vmatpush1.msra.mxu0 0.0
    %905 = vmatprep.subr.mxu0 0.0
    %906 = vmatpush1.msra.mxu0 0.0
    %907 = vmatprep.subr.mxu0 0.0
    %908 = vmatpush1.msra.mxu0 0.0
    %909 = vmatprep.subr.mxu0 0.0
    %910 = vmatpush1.msra.mxu0 0.0
    %911 = vmatprep.subr.mxu0 0.0
    %912 = vmatpush1.msra.mxu0 0.0
    %913 = vmatprep.subr.mxu0 0.0
    %914 = vmatpush1.msra.mxu0 0.0
    %915 = vmatprep.subr.mxu0 0.0
    %916 = vmatpush1.msra.mxu0 0.0
    %917 = vmatprep.subr.mxu0 0.0
    %918 = vmatpush1.msra.mxu0 0.0
    %919 = vmatprep.subr.mxu0 0.0
    %920 = vmatpush1.msra.mxu0 0.0
    %921 = vmatprep.subr.mxu0 0.0
    %922 = vmatpush1.msra.mxu0 0.0
    %923 = vmatprep.subr.mxu0 0.0
    %924 = vmatpush1.msra.mxu0 0.0
    %925 = vmatprep.subr.mxu0 0.0
    %926 = vmatpush1.msra.mxu0 0.0
    %927 = vmatprep.subr.mxu0 0.0
    %928 = vmatpush1.msra.mxu0 0.0
    %929 = vmatprep.subr.mxu0 0.0
    %930 = vmatpush1.msra.mxu0 0.0
    %931 = vmatprep.subr.mxu0 0.0
    %932 = vmatpush1.msra.mxu0 0.0
    %933 = vmatprep.subr.mxu0 0.0
    %934 = vmatpush1.msra.mxu0 0.0
    %935 = vmatprep.subr.mxu0 0.0
    %936 = vmatpush1.msra.mxu0 0.0
    %937 = vmatprep.subr.mxu0 0.0
    %938 = vmatpush1.msra.mxu0 0.0
    %939 = vmatprep.subr.mxu0 0.0
    %940 = vmatpush1.msra.mxu0 0.0
    %941 = vmatprep.subr.mxu0 0.0
    %942 = vmatpush1.msra.mxu0 0.0
    %943 = vmatprep.subr.mxu0 0.0
    %944 = vmatpush1.msra.mxu0 0.0
    %945 = vmatprep.subr.mxu0 0.0
    %946 = vmatpush1.msra.mxu0 0.0
    %947 = vmatprep.subr.mxu0 0.0
    %948 = vmatpush1.msra.mxu0 0.0
    %949 = vmatprep.subr.mxu0 0.0
    %950 = vmatpush1.msra.mxu0 0.0
    %951 = vmatprep.subr.mxu0 0.0
    %952 = vmatpush1.msra.mxu0 0.0
    %953 = vmatprep.subr.mxu0 0.0
    %954 = vmatpush1.msra.mxu0 0.0
    %955 = vmatprep.subr.mxu0 0.0
    %956 = vmatpush1.msra.mxu0 0.0
    %957 = vmatprep.subr.mxu0 0.0
    %958 = vmatpush1.msra.mxu0 0.0
    %959 = vmatprep.mubr.f32.mxu0 0.0
    %960 = vmatmul.mubr.f32.gmra.mrb[0].mxu0 %v890
    %v961 = vpop.f32.mrb[0].mxu0
    %v962 = vadd.f32 %v887, %v961
    %v963 = vpop.f32.mrb[0].mxu0
    %964 = vmatprep.mubr.f32.mxu0 0.0
    %965 = vmatmul.mubr.f32.gmra.mrb[0].mxu0 %v893
    %v966 = vpop.f32.mrb[0].mxu0
    %v967 = vadd.f32 %v887, %v966
    %v968 = vpop.f32.mrb[0].mxu0
    %969 = vdwg.mxu0
    %v970 = vadd.f32 %v782, %v962
    %v971 = vadd.f32 %v783, %v967
    %v972 = vld [vmem:[%s15] sm:$0x1]
    %v973 = vld [vmem:[%s16] sm:$0x1]
    %v974 = vsel %vm198, %v970, 0.0
    %975 = vadd.xlane.f32.xlu0 %v974
    %v976 = vpop.xlane.xlu0 %975
    %v977 = vsel %vm198, %v971, 0.0
    %978 = vadd.xlane.f32.xlu0 %v977
    %v979 = vpop.xlane.xlu0 %978
    %v980 = vmul.f32 %v976, %v747
    %v981 = vmul.f32 %v979, %v747
    %v982 = vsub.f32 %v970, %v980
    %v983 = vsub.f32 %v971, %v981
    %v984 = vmul.f32 %v982, %v982
    %v985 = vmul.f32 %v983, %v983
    %v986 = vsel %vm198, %v984, 0.0
    %987 = vadd.xlane.f32.xlu0 %v986
    %v988 = vpop.xlane.xlu0 %987
    %v989 = vsel %vm198, %v985, 0.0
    %990 = vadd.xlane.f32.xlu0 %v989
    %v991 = vpop.xlane.xlu0 %990
    %v992 = vmul.f32 %v988, %v747
    %v993 = vmul.f32 %v991, %v747
    %v994 = vadd.f32 %v992, 1e-05
    %v995 = vadd.f32 %v993, 1e-05
    %v996 = vrsqrt.pop %v994
    %v997 = vrsqrt.pop %v995
    %v998 = vmul.f32 %v982, %v996
    %v999 = vmul.f32 %v983, %v997
    %v1001 = vlaneseq
    %v1002 = vshrl.u32 %v1001, 7
    %v1003 = vsub.s32 0, %v1002
    %v1004 = vrot.slane %v972, %v1003
    %v1006 = vmul.f32 %v998, %v1004
    %v1007 = vmul.f32 %v999, %v1004
    %v1009 = vlaneseq
    %v1010 = vshrl.u32 %v1009, 7
    %v1011 = vsub.s32 0, %v1010
    %v1012 = vrot.slane %v973, %v1011
    %v1014 = vadd.f32 %v1006, %v1012
    %v1015 = vadd.f32 %v1007, %v1012
    %s1016 = scalar_lea.vmem %s5, 32
    %v1017 = vld [vmem:[%s1016] sm:$0xff]
    %v1018 = vld [vmem:[%s1016 + $0x8] sm:$0xff]
    %v1019 = vld [vmem:[%s1016 + $0x10] sm:$0xff]
    %v1020 = vld [vmem:[%s1016 + $0x18] sm:$0xff]
    %s1021 = scalar_lea.vmem %s6, 1
    %v1022 = vld [vmem:[%s1021] sm:$0x1]
    %v1024 = vlaneseq
    %v1025 = vshrl.u32 %v1024, 7
    %v1026 = vsub.s32 0, %v1025
    %v1027 = vrot.slane %v1022, %v1026
    %v1030 = vsel %vm198, %v1014, 0
    %v1033 = vsel %vm198, %v1015, 0
    %1035 = vmatprep.subr.mxu0 0.0
    %1036 = vmatpush1.msra.mxu0 %v1017
    %1037 = vmatprep.subr.mxu0 0.0
    %1038 = vmatpush1.msra.mxu0 %v1018
    %1039 = vmatprep.subr.mxu0 0.0
    %1040 = vmatpush1.msra.mxu0 %v1019
    %1041 = vmatprep.subr.mxu0 0.0
    %1042 = vmatpush1.msra.mxu0 %v1020
    %1043 = vmatprep.subr.mxu0 0.0
    %1044 = vmatpush1.msra.mxu0 0.0
    %1045 = vmatprep.subr.mxu0 0.0
    %1046 = vmatpush1.msra.mxu0 0.0
    %1047 = vmatprep.subr.mxu0 0.0
    %1048 = vmatpush1.msra.mxu0 0.0
    %1049 = vmatprep.subr.mxu0 0.0
    %1050 = vmatpush1.msra.mxu0 0.0
    %1051 = vmatprep.subr.mxu0 0.0
    %1052 = vmatpush1.msra.mxu0 0.0
    %1053 = vmatprep.subr.mxu0 0.0
    %1054 = vmatpush1.msra.mxu0 0.0
    %1055 = vmatprep.subr.mxu0 0.0
    %1056 = vmatpush1.msra.mxu0 0.0
    %1057 = vmatprep.subr.mxu0 0.0
    %1058 = vmatpush1.msra.mxu0 0.0
    %1059 = vmatprep.subr.mxu0 0.0
    %1060 = vmatpush1.msra.mxu0 0.0
    %1061 = vmatprep.subr.mxu0 0.0
    %1062 = vmatpush1.msra.mxu0 0.0
    %1063 = vmatprep.subr.mxu0 0.0
    %1064 = vmatpush1.msra.mxu0 0.0
    %1065 = vmatprep.subr.mxu0 0.0
    %1066 = vmatpush1.msra.mxu0 0.0
    %1067 = vmatprep.subr.mxu0 0.0
    %1068 = vmatpush1.msra.mxu0 0.0
    %1069 = vmatprep.subr.mxu0 0.0
    %1070 = vmatpush1.msra.mxu0 0.0
    %1071 = vmatprep.subr.mxu0 0.0
    %1072 = vmatpush1.msra.mxu0 0.0
    %1073 = vmatprep.subr.mxu0 0.0
    %1074 = vmatpush1.msra.mxu0 0.0
    %1075 = vmatprep.subr.mxu0 0.0
    %1076 = vmatpush1.msra.mxu0 0.0
    %1077 = vmatprep.subr.mxu0 0.0
    %1078 = vmatpush1.msra.mxu0 0.0
    %1079 = vmatprep.subr.mxu0 0.0
    %1080 = vmatpush1.msra.mxu0 0.0
    %1081 = vmatprep.subr.mxu0 0.0
    %1082 = vmatpush1.msra.mxu0 0.0
    %1083 = vmatprep.subr.mxu0 0.0
    %1084 = vmatpush1.msra.mxu0 0.0
    %1085 = vmatprep.subr.mxu0 0.0
    %1086 = vmatpush1.msra.mxu0 0.0
    %1087 = vmatprep.subr.mxu0 0.0
    %1088 = vmatpush1.msra.mxu0 0.0
    %1089 = vmatprep.subr.mxu0 0.0
    %1090 = vmatpush1.msra.mxu0 0.0
    %1091 = vmatprep.subr.mxu0 0.0
    %1092 = vmatpush1.msra.mxu0 0.0
    %1093 = vmatprep.subr.mxu0 0.0
    %1094 = vmatpush1.msra.mxu0 0.0
    %1095 = vmatprep.subr.mxu0 0.0
    %1096 = vmatpush1.msra.mxu0 0.0
    %1097 = vmatprep.subr.mxu0 0.0
    %1098 = vmatpush1.msra.mxu0 0.0
    %1099 = vmatprep.mubr.f32.mxu0 0.0
    %1100 = vmatmul.mubr.f32.gmra.mrb[0].mxu0 %v1030
    %v1101 = vpop.f32.mrb[0].mxu0
    %v1102 = vadd.f32 %v1027, %v1101
    %v1103 = vpop.f32.mrb[0].mxu0
    %1104 = vmatprep.mubr.f32.mxu0 0.0
    %1105 = vmatmul.mubr.f32.gmra.mrb[0].mxu0 %v1033
    %v1106 = vpop.f32.mrb[0].mxu0
    %v1107 = vadd.f32 %v1027, %v1106
    %v1108 = vpop.f32.mrb[0].mxu0
    %1109 = vdwg.mxu0
    %1112 = vrot.lane.b32.xlu0 %v1102, 96
    %v1113 = vpop.permute.xlu0 %1112
    %1114 = vrot.lane.b32.xlu0 %v1107, 96
    %v1115 = vpop.permute.xlu0 %1114
    %1118 = vmatprep.subr.mxu0 0.0
    %1119 = vmatpush1.msra.mxu0 %v1113
    %1120 = vmatprep.subr.mxu0 0.0
    %1121 = vmatpush1.msra.mxu0 %v1115
    %1122 = vmatprep.subr.mxu0 0.0
    %1123 = vmatpush1.msra.mxu0 0.0
    %1124 = vmatprep.subr.mxu0 0.0
    %1125 = vmatpush1.msra.mxu0 0.0
    %1126 = vmatprep.subr.mxu0 0.0
    %1127 = vmatpush1.msra.mxu0 0.0
    %1128 = vmatprep.subr.mxu0 0.0
    %1129 = vmatpush1.msra.mxu0 0.0
    %1130 = vmatprep.subr.mxu0 0.0
    %1131 = vmatpush1.msra.mxu0 0.0
    %1132 = vmatprep.subr.mxu0 0.0
    %1133 = vmatpush1.msra.mxu0 0.0
    %1134 = vmatprep.subr.mxu0 0.0
    %1135 = vmatpush1.msra.mxu0 0.0
    %1136 = vmatprep.subr.mxu0 0.0
    %1137 = vmatpush1.msra.mxu0 0.0
    %1138 = vmatprep.subr.mxu0 0.0
    %1139 = vmatpush1.msra.mxu0 0.0
    %1140 = vmatprep.subr.mxu0 0.0
    %1141 = vmatpush1.msra.mxu0 0.0
    %1142 = vmatprep.subr.mxu0 0.0
    %1143 = vmatpush1.msra.mxu0 0.0
    %1144 = vmatprep.subr.mxu0 0.0
    %1145 = vmatpush1.msra.mxu0 0.0
    %1146 = vmatprep.subr.mxu0 0.0
    %1147 = vmatpush1.msra.mxu0 0.0
    %1148 = vmatprep.subr.mxu0 0.0
    %1149 = vmatpush1.msra.mxu0 0.0
    %1150 = vmatprep.subr.mxu0 0.0
    %1151 = vmatpush1.msra.mxu0 0.0
    %1152 = vmatprep.subr.mxu0 0.0
    %1153 = vmatpush1.msra.mxu0 0.0
    %1154 = vmatprep.subr.mxu0 0.0
    %1155 = vmatpush1.msra.mxu0 0.0
    %1156 = vmatprep.subr.mxu0 0.0
    %1157 = vmatpush1.msra.mxu0 0.0
    %1158 = vmatprep.subr.mxu0 0.0
    %1159 = vmatpush1.msra.mxu0 0.0
    %1160 = vmatprep.subr.mxu0 0.0
    %1161 = vmatpush1.msra.mxu0 0.0
    %1162 = vmatprep.subr.mxu0 0.0
    %1163 = vmatpush1.msra.mxu0 0.0
    %1164 = vmatprep.subr.mxu0 0.0
    %1165 = vmatpush1.msra.mxu0 0.0
    %1166 = vmatprep.subr.mxu0 0.0
    %1167 = vmatpush1.msra.mxu0 0.0
    %1168 = vmatprep.subr.mxu0 0.0
    %1169 = vmatpush1.msra.mxu0 0.0
    %1170 = vmatprep.subr.mxu0 0.0
    %1171 = vmatpush1.msra.mxu0 0.0
    %1172 = vmatprep.subr.mxu0 0.0
    %1173 = vmatpush1.msra.mxu0 0.0
    %1174 = vmatprep.subr.mxu0 0.0
    %1175 = vmatpush1.msra.mxu0 0.0
    %1176 = vmatprep.subr.mxu0 0.0
    %1177 = vmatpush1.msra.mxu0 0.0
    %1178 = vmatprep.subr.mxu0 0.0
    %1179 = vmatpush1.msra.mxu0 0.0
    %1180 = vmatprep.subr.mxu0 0.0
    %1181 = vmatpush1.msra.mxu0 0.0
    %1182 = vmatprep.mubr.f32.mxu0 0.0
    %1183 = vmatmul.mubr.f32.gmra.mrb[0].mxu0 %v292
    %v1184 = vpop.f32.mrb[0].mxu0
    %v1185 = vadd.f32 0.0, %v1184
    %v1186 = vpop.f32.mrb[0].mxu0
    %1187 = vmatprep.mubr.f32.mxu0 0.0
    %1188 = vmatmul.mubr.f32.gmra.mrb[0].mxu0 %v295
    %v1189 = vpop.f32.mrb[0].mxu0
    %v1190 = vadd.f32 0.0, %v1189
    %v1191 = vpop.f32.mrb[0].mxu0
    %1192 = vdwg.mxu0
    %1193 = vrot.lane.b32.xlu0 %v1102, 64
    %v1194 = vpop.permute.xlu0 %1193
    %1195 = vrot.lane.b32.xlu0 %v1107, 64
    %v1196 = vpop.permute.xlu0 %1195
    %1199 = vmatprep.subr.mxu0 0.0
    %1200 = vmatpush1.msra.mxu0 %v1194
    %1201 = vmatprep.subr.mxu0 0.0
    %1202 = vmatpush1.msra.mxu0 %v1196
    %1203 = vmatprep.subr.mxu0 0.0
    %1204 = vmatpush1.msra.mxu0 0.0
    %1205 = vmatprep.subr.mxu0 0.0
    %1206 = vmatpush1.msra.mxu0 0.0
    %1207 = vmatprep.subr.mxu0 0.0
    %1208 = vmatpush1.msra.mxu0 0.0
    %1209 = vmatprep.subr.mxu0 0.0
    %1210 = vmatpush1.msra.mxu0 0.0
    %1211 = vmatprep.subr.mxu0 0.0
    %1212 = vmatpush1.msra.mxu0 0.0
    %1213 = vmatprep.subr.mxu0 0.0
    %1214 = vmatpush1.msra.mxu0 0.0
    %1215 = vmatprep.subr.mxu0 0.0
    %1216 = vmatpush1.msra.mxu0 0.0
    %1217 = vmatprep.subr.mxu0 0.0
    %1218 = vmatpush1.msra.mxu0 0.0
    %1219 = vmatprep.subr.mxu0 0.0
    %1220 = vmatpush1.msra.mxu0 0.0
    %1221 = vmatprep.subr.mxu0 0.0
    %1222 = vmatpush1.msra.mxu0 0.0
    %1223 = vmatprep.subr.mxu0 0.0
    %1224 = vmatpush1.msra.mxu0 0.0
    %1225 = vmatprep.subr.mxu0 0.0
    %1226 = vmatpush1.msra.mxu0 0.0
    %1227 = vmatprep.subr.mxu0 0.0
    %1228 = vmatpush1.msra.mxu0 0.0
    %1229 = vmatprep.subr.mxu0 0.0
    %1230 = vmatpush1.msra.mxu0 0.0
    %1231 = vmatprep.subr.mxu0 0.0
    %1232 = vmatpush1.msra.mxu0 0.0
    %1233 = vmatprep.subr.mxu0 0.0
    %1234 = vmatpush1.msra.mxu0 0.0
    %1235 = vmatprep.subr.mxu0 0.0
    %1236 = vmatpush1.msra.mxu0 0.0
    %1237 = vmatprep.subr.mxu0 0.0
    %1238 = vmatpush1.msra.mxu0 0.0
    %1239 = vmatprep.subr.mxu0 0.0
    %1240 = vmatpush1.msra.mxu0 0.0
    %1241 = vmatprep.subr.mxu0 0.0
    %1242 = vmatpush1.msra.mxu0 0.0
    %1243 = vmatprep.subr.mxu0 0.0
    %1244 = vmatpush1.msra.mxu0 0.0
    %1245 = vmatprep.subr.mxu0 0.0
    %1246 = vmatpush1.msra.mxu0 0.0
    %1247 = vmatprep.subr.mxu0 0.0
    %1248 = vmatpush1.msra.mxu0 0.0
    %1249 = vmatprep.subr.mxu0 0.0
    %1250 = vmatpush1.msra.mxu0 0.0
    %1251 = vmatprep.subr.mxu0 0.0
    %1252 = vmatpush1.msra.mxu0 0.0
    %1253 = vmatprep.subr.mxu0 0.0
    %1254 = vmatpush1.msra.mxu0 0.0
    %1255 = vmatprep.subr.mxu0 0.0
    %1256 = vmatpush1.msra.mxu0 0.0
    %1257 = vmatprep.subr.mxu0 0.0
    %1258 = vmatpush1.msra.mxu0 0.0
    %1259 = vmatprep.subr.mxu0 0.0
    %1260 = vmatpush1.msra.mxu0 0.0
    %1261 = vmatprep.subr.mxu0 0.0
    %1262 = vmatpush1.msra.mxu0 0.0
    %1263 = vmatprep.mubr.f32.mxu0 0.0
    %1264 = vmatmul.mubr.f32.gmra.mrb[0].mxu0 %v292
    %v1265 = vpop.f32.mrb[0].mxu0
    %v1266 = vadd.f32 0.0, %v1265
    %v1267 = vpop.f32.mrb[0].mxu0
    %1268 = vmatprep.mubr.f32.mxu0 0.0
    %1269 = vmatmul.mubr.f32.gmra.mrb[0].mxu0 %v295
    %v1270 = vpop.f32.mrb[0].mxu0
    %v1271 = vadd.f32 0.0, %v1270
    %v1272 = vpop.f32.mrb[0].mxu0
    %1273 = vdwg.mxu0
    %v1274 = vmul.f32 %v1102, %v1113
    %v1275 = vmul.f32 %v1107, %v1115
    %v1277 = vsel %vm198, %v1274, 0
    %v1280 = vsel %vm198, %v1275, 0
    %1282 = vmatprep.subr.mxu0 0.0
    %1283 = vmatpush1.msra.mxu0 %v183
    %1284 = vmatprep.subr.mxu0 0.0
    %1285 = vmatpush1.msra.mxu0 %v184
    %1286 = vmatprep.subr.mxu0 0.0
    %1287 = vmatpush1.msra.mxu0 %v185
    %1288 = vmatprep.subr.mxu0 0.0
    %1289 = vmatpush1.msra.mxu0 %v186
    %1290 = vmatprep.subr.mxu0 0.0
    %1291 = vmatpush1.msra.mxu0 0.0
    %1292 = vmatprep.subr.mxu0 0.0
    %1293 = vmatpush1.msra.mxu0 0.0
    %1294 = vmatprep.subr.mxu0 0.0
    %1295 = vmatpush1.msra.mxu0 0.0
    %1296 = vmatprep.subr.mxu0 0.0
    %1297 = vmatpush1.msra.mxu0 0.0
    %1298 = vmatprep.subr.mxu0 0.0
    %1299 = vmatpush1.msra.mxu0 0.0
    %1300 = vmatprep.subr.mxu0 0.0
    %1301 = vmatpush1.msra.mxu0 0.0
    %1302 = vmatprep.subr.mxu0 0.0
    %1303 = vmatpush1.msra.mxu0 0.0
    %1304 = vmatprep.subr.mxu0 0.0
    %1305 = vmatpush1.msra.mxu0 0.0
    %1306 = vmatprep.subr.mxu0 0.0
    %1307 = vmatpush1.msra.mxu0 0.0
    %1308 = vmatprep.subr.mxu0 0.0
    %1309 = vmatpush1.msra.mxu0 0.0
    %1310 = vmatprep.subr.mxu0 0.0
    %1311 = vmatpush1.msra.mxu0 0.0
    %1312 = vmatprep.subr.mxu0 0.0
    %1313 = vmatpush1.msra.mxu0 0.0
    %1314 = vmatprep.subr.mxu0 0.0
    %1315 = vmatpush1.msra.mxu0 0.0
    %1316 = vmatprep.subr.mxu0 0.0
    %1317 = vmatpush1.msra.mxu0 0.0
    %1318 = vmatprep.subr.mxu0 0.0
    %1319 = vmatpush1.msra.mxu0 0.0
    %1320 = vmatprep.subr.mxu0 0.0
    %1321 = vmatpush1.msra.mxu0 0.0
    %1322 = vmatprep.subr.mxu0 0.0
    %1323 = vmatpush1.msra.mxu0 0.0
    %1324 = vmatprep.subr.mxu0 0.0
    %1325 = vmatpush1.msra.mxu0 0.0
    %1326 = vmatprep.subr.mxu0 0.0
    %1327 = vmatpush1.msra.mxu0 0.0
    %1328 = vmatprep.subr.mxu0 0.0
    %1329 = vmatpush1.msra.mxu0 0.0
    %1330 = vmatprep.subr.mxu0 0.0
    %1331 = vmatpush1.msra.mxu0 0.0
    %1332 = vmatprep.subr.mxu0 0.0
    %1333 = vmatpush1.msra.mxu0 0.0
    %1334 = vmatprep.subr.mxu0 0.0
    %1335 = vmatpush1.msra.mxu0 0.0
    %1336 = vmatprep.subr.mxu0 0.0
    %1337 = vmatpush1.msra.mxu0 0.0
    %1338 = vmatprep.subr.mxu0 0.0
    %1339 = vmatpush1.msra.mxu0 0.0
    %1340 = vmatprep.subr.mxu0 0.0
    %1341 = vmatpush1.msra.mxu0 0.0
    %1342 = vmatprep.subr.mxu0 0.0
    %1343 = vmatpush1.msra.mxu0 0.0
    %1344 = vmatprep.subr.mxu0 0.0
    %1345 = vmatpush1.msra.mxu0 0.0
    %1346 = vmatprep.mubr.f32.mxu0 0.0
    %1347 = vmatmul.mubr.f32.gmra.mrb[0].mxu0 %v1277
    %v1348 = vpop.f32.mrb[0].mxu0
    %v1349 = vadd.f32 0.0, %v1348
    %v1350 = vpop.f32.mrb[0].mxu0
    %1351 = vmatprep.mubr.f32.mxu0 0.0
    %1352 = vmatmul.mubr.f32.gmra.mrb[0].mxu0 %v1280
    %v1353 = vpop.f32.mrb[0].mxu0
    %v1354 = vadd.f32 0.0, %v1353
    %v1355 = vpop.f32.mrb[0].mxu0
    %1356 = vdwg.mxu0
    %v1357 = vmul.f32 %v1102, %v1185
    %v1358 = vmul.f32 %v1107, %v1190
    %v1360 = vsel %vm198, %v1357, 0
    %v1363 = vsel %vm198, %v1358, 0
    %1365 = vmatprep.subr.mxu0 0.0
    %1366 = vmatpush1.msra.mxu0 %v183
    %1367 = vmatprep.subr.mxu0 0.0
    %1368 = vmatpush1.msra.mxu0 %v184
    %1369 = vmatprep.subr.mxu0 0.0
    %1370 = vmatpush1.msra.mxu0 %v185
    %1371 = vmatprep.subr.mxu0 0.0
    %1372 = vmatpush1.msra.mxu0 %v186
    %1373 = vmatprep.subr.mxu0 0.0
    %1374 = vmatpush1.msra.mxu0 0.0
    %1375 = vmatprep.subr.mxu0 0.0
    %1376 = vmatpush1.msra.mxu0 0.0
    %1377 = vmatprep.subr.mxu0 0.0
    %1378 = vmatpush1.msra.mxu0 0.0
    %1379 = vmatprep.subr.mxu0 0.0
    %1380 = vmatpush1.msra.mxu0 0.0
    %1381 = vmatprep.subr.mxu0 0.0
    %1382 = vmatpush1.msra.mxu0 0.0
    %1383 = vmatprep.subr.mxu0 0.0
    %1384 = vmatpush1.msra.mxu0 0.0
    %1385 = vmatprep.subr.mxu0 0.0
    %1386 = vmatpush1.msra.mxu0 0.0
    %1387 = vmatprep.subr.mxu0 0.0
    %1388 = vmatpush1.msra.mxu0 0.0
    %1389 = vmatprep.subr.mxu0 0.0
    %1390 = vmatpush1.msra.mxu0 0.0
    %1391 = vmatprep.subr.mxu0 0.0
    %1392 = vmatpush1.msra.mxu0 0.0
    %1393 = vmatprep.subr.mxu0 0.0
    %1394 = vmatpush1.msra.mxu0 0.0
    %1395 = vmatprep.subr.mxu0 0.0
    %1396 = vmatpush1.msra.mxu0 0.0
    %1397 = vmatprep.subr.mxu0 0.0
    %1398 = vmatpush1.msra.mxu0 0.0
    %1399 = vmatprep.subr.mxu0 0.0
    %1400 = vmatpush1.msra.mxu0 0.0
    %1401 = vmatprep.subr.mxu0 0.0
    %1402 = vmatpush1.msra.mxu0 0.0
    %1403 = vmatprep.subr.mxu0 0.0
    %1404 = vmatpush1.msra.mxu0 0.0
    %1405 = vmatprep.subr.mxu0 0.0
    %1406 = vmatpush1.msra.mxu0 0.0
    %1407 = vmatprep.subr.mxu0 0.0
    %1408 = vmatpush1.msra.mxu0 0.0
    %1409 = vmatprep.subr.mxu0 0.0
    %1410 = vmatpush1.msra.mxu0 0.0
    %1411 = vmatprep.subr.mxu0 0.0
    %1412 = vmatpush1.msra.mxu0 0.0
    %1413 = vmatprep.subr.mxu0 0.0
    %1414 = vmatpush1.msra.mxu0 0.0
    %1415 = vmatprep.subr.mxu0 0.0
    %1416 = vmatpush1.msra.mxu0 0.0
    %1417 = vmatprep.subr.mxu0 0.0
    %1418 = vmatpush1.msra.mxu0 0.0
    %1419 = vmatprep.subr.mxu0 0.0
    %1420 = vmatpush1.msra.mxu0 0.0
    %1421 = vmatprep.subr.mxu0 0.0
    %1422 = vmatpush1.msra.mxu0 0.0
    %1423 = vmatprep.subr.mxu0 0.0
    %1424 = vmatpush1.msra.mxu0 0.0
    %1425 = vmatprep.subr.mxu0 0.0
    %1426 = vmatpush1.msra.mxu0 0.0
    %1427 = vmatprep.subr.mxu0 0.0
    %1428 = vmatpush1.msra.mxu0 0.0
    %1429 = vmatprep.mubr.f32.mxu0 0.0
    %1430 = vmatmul.mubr.f32.gmra.mrb[0].mxu0 %v1360
    %v1431 = vpop.f32.mrb[0].mxu0
    %v1432 = vadd.f32 0.0, %v1431
    %v1433 = vpop.f32.mrb[0].mxu0
    %1434 = vmatprep.mubr.f32.mxu0 0.0
    %1435 = vmatmul.mubr.f32.gmra.mrb[0].mxu0 %v1363
    %v1436 = vpop.f32.mrb[0].mxu0
    %v1437 = vadd.f32 0.0, %v1436
    %v1438 = vpop.f32.mrb[0].mxu0
    %1439 = vdwg.mxu0
    %v1440 = vmax.f32 %v1349, %v1432
    %v1441 = vmax.f32 %v1354, %v1437
    %v1442 = vsub.f32 %v1349, %v1440
    %v1443 = vsub.f32 %v1354, %v1441
    %v1444 = vmul.f32 %v1442, 1.442695
    %v1445 = vpow.pop %v1444
    %v1446 = vmul.f32 %v1443, 1.442695
    %v1447 = vpow.pop %v1446
    %v1448 = vsub.f32 %v1432, %v1440
    %v1449 = vsub.f32 %v1437, %v1441
    %v1450 = vmul.f32 %v1448, 1.442695
    %v1451 = vpow.pop %v1450
    %v1452 = vmul.f32 %v1449, 1.442695
    %v1453 = vpow.pop %v1452
    %v1454 = vadd.f32 %v1445, %v1451
    %v1455 = vadd.f32 %v1447, %v1453
    %v1456 = vrcp.pop %v1454
    %v1457 = vrcp.pop %v1455
    %v1458 = vmul.f32 %v1445, %v1194
    %v1459 = vmul.f32 %v1447, %v1196
    %v1460 = vmul.f32 %v1451, %v1266
    %v1461 = vmul.f32 %v1453, %v1271
    %v1462 = vadd.f32 %v1458, %v1460
    %v1463 = vadd.f32 %v1459, %v1461
    %v1464 = vmul.f32 %v1462, %v1456
    %v1465 = vmul.f32 %v1463, %v1457
    %s1466 = scalar_lea.vmem %s7, 32
    %v1467 = vld [vmem:[%s1466] sm:$0xff]
    %v1468 = vld [vmem:[%s1466 + $0x8] sm:$0xff]
    %v1469 = vld [vmem:[%s1466 + $0x10] sm:$0xff]
    %v1470 = vld [vmem:[%s1466 + $0x18] sm:$0xff]
    %s1471 = scalar_lea.vmem %s8, 1
    %v1472 = vld [vmem:[%s1471] sm:$0x1]
    %v1474 = vlaneseq
    %v1475 = vshrl.u32 %v1474, 7
    %v1476 = vsub.s32 0, %v1475
    %v1477 = vrot.slane %v1472, %v1476
    %v1480 = vsel %vm198, %v1464, 0
    %v1483 = vsel %vm198, %v1465, 0
    %1485 = vmatprep.subr.mxu0 0.0
    %1486 = vmatpush1.msra.mxu0 %v1467
    %1487 = vmatprep.subr.mxu0 0.0
    %1488 = vmatpush1.msra.mxu0 %v1468
    %1489 = vmatprep.subr.mxu0 0.0
    %1490 = vmatpush1.msra.mxu0 %v1469
    %1491 = vmatprep.subr.mxu0 0.0
    %1492 = vmatpush1.msra.mxu0 %v1470
    %1493 = vmatprep.subr.mxu0 0.0
    %1494 = vmatpush1.msra.mxu0 0.0
    %1495 = vmatprep.subr.mxu0 0.0
    %1496 = vmatpush1.msra.mxu0 0.0
    %1497 = vmatprep.subr.mxu0 0.0
    %1498 = vmatpush1.msra.mxu0 0.0
    %1499 = vmatprep.subr.mxu0 0.0
    %1500 = vmatpush1.msra.mxu0 0.0
    %1501 = vmatprep.subr.mxu0 0.0
    %1502 = vmatpush1.msra.mxu0 0.0
    %1503 = vmatprep.subr.mxu0 0.0
    %1504 = vmatpush1.msra.mxu0 0.0
    %1505 = vmatprep.subr.mxu0 0.0
    %1506 = vmatpush1.msra.mxu0 0.0
    %1507 = vmatprep.subr.mxu0 0.0
    %1508 = vmatpush1.msra.mxu0 0.0
    %1509 = vmatprep.subr.mxu0 0.0
    %1510 = vmatpush1.msra.mxu0 0.0
    %1511 = vmatprep.subr.mxu0 0.0
    %1512 = vmatpush1.msra.mxu0 0.0
    %1513 = vmatprep.subr.mxu0 0.0
    %1514 = vmatpush1.msra.mxu0 0.0
    %1515 = vmatprep.subr.mxu0 0.0
    %1516 = vmatpush1.msra.mxu0 0.0
    %1517 = vmatprep.subr.mxu0 0.0
    %1518 = vmatpush1.msra.mxu0 0.0
    %1519 = vmatprep.subr.mxu0 0.0
    %1520 = vmatpush1.msra.mxu0 0.0
    %1521 = vmatprep.subr.mxu0 0.0
    %1522 = vmatpush1.msra.mxu0 0.0
    %1523 = vmatprep.subr.mxu0 0.0
    %1524 = vmatpush1.msra.mxu0 0.0
    %1525 = vmatprep.subr.mxu0 0.0
    %1526 = vmatpush1.msra.mxu0 0.0
    %1527 = vmatprep.subr.mxu0 0.0
    %1528 = vmatpush1.msra.mxu0 0.0
    %1529 = vmatprep.subr.mxu0 0.0
    %1530 = vmatpush1.msra.mxu0 0.0
    %1531 = vmatprep.subr.mxu0 0.0
    %1532 = vmatpush1.msra.mxu0 0.0
    %1533 = vmatprep.subr.mxu0 0.0
    %1534 = vmatpush1.msra.mxu0 0.0
    %1535 = vmatprep.subr.mxu0 0.0
    %1536 = vmatpush1.msra.mxu0 0.0
    %1537 = vmatprep.subr.mxu0 0.0
    %1538 = vmatpush1.msra.mxu0 0.0
    %1539 = vmatprep.subr.mxu0 0.0
    %1540 = vmatpush1.msra.mxu0 0.0
    %1541 = vmatprep.subr.mxu0 0.0
    %1542 = vmatpush1.msra.mxu0 0.0
    %1543 = vmatprep.subr.mxu0 0.0
    %1544 = vmatpush1.msra.mxu0 0.0
    %1545 = vmatprep.subr.mxu0 0.0
    %1546 = vmatpush1.msra.mxu0 0.0
    %1547 = vmatprep.subr.mxu0 0.0
    %1548 = vmatpush1.msra.mxu0 0.0
    %1549 = vmatprep.mubr.f32.mxu0 0.0
    %1550 = vmatmul.mubr.f32.gmra.mrb[0].mxu0 %v1480
    %v1551 = vpop.f32.mrb[0].mxu0
    %v1552 = vadd.f32 %v1477, %v1551
    %v1553 = vpop.f32.mrb[0].mxu0
    %1554 = vmatprep.mubr.f32.mxu0 0.0
    %1555 = vmatmul.mubr.f32.gmra.mrb[0].mxu0 %v1483
    %v1556 = vpop.f32.mrb[0].mxu0
    %v1557 = vadd.f32 %v1477, %v1556
    %v1558 = vpop.f32.mrb[0].mxu0
    %1559 = vdwg.mxu0
    %v1560 = vadd.f32 %v1014, %v1552
    %v1561 = vadd.f32 %v1015, %v1557
    %s1562 = scalar_lea.vmem %s9, 1
    %v1563 = vld [vmem:[%s1562] sm:$0x1]
    %s1564 = scalar_lea.vmem %s10, 1
    %v1565 = vld [vmem:[%s1564] sm:$0x1]
    %v1566 = vsel %vm198, %v1560, 0.0
    %1567 = vadd.xlane.f32.xlu0 %v1566
    %v1568 = vpop.xlane.xlu0 %1567
    %v1569 = vsel %vm198, %v1561, 0.0
    %1570 = vadd.xlane.f32.xlu0 %v1569
    %v1571 = vpop.xlane.xlu0 %1570
    %v1572 = vmul.f32 %v1568, %v747
    %v1573 = vmul.f32 %v1571, %v747
    %v1574 = vsub.f32 %v1560, %v1572
    %v1575 = vsub.f32 %v1561, %v1573
    %v1576 = vmul.f32 %v1574, %v1574
    %v1577 = vmul.f32 %v1575, %v1575
    %v1578 = vsel %vm198, %v1576, 0.0
    %1579 = vadd.xlane.f32.xlu0 %v1578
    %v1580 = vpop.xlane.xlu0 %1579
    %v1581 = vsel %vm198, %v1577, 0.0
    %1582 = vadd.xlane.f32.xlu0 %v1581
    %v1583 = vpop.xlane.xlu0 %1582
    %v1584 = vmul.f32 %v1580, %v747
    %v1585 = vmul.f32 %v1583, %v747
    %v1586 = vadd.f32 %v1584, 1e-05
    %v1587 = vadd.f32 %v1585, 1e-05
    %v1588 = vrsqrt.pop %v1586
    %v1589 = vrsqrt.pop %v1587
    %v1590 = vmul.f32 %v1574, %v1588
    %v1591 = vmul.f32 %v1575, %v1589
    %v1593 = vlaneseq
    %v1594 = vshrl.u32 %v1593, 7
    %v1595 = vsub.s32 0, %v1594
    %v1596 = vrot.slane %v1563, %v1595
    %v1598 = vmul.f32 %v1590, %v1596
    %v1599 = vmul.f32 %v1591, %v1596
    %v1601 = vlaneseq
    %v1602 = vshrl.u32 %v1601, 7
    %v1603 = vsub.s32 0, %v1602
    %v1604 = vrot.slane %v1565, %v1603
    %v1606 = vadd.f32 %v1598, %v1604
    %v1607 = vadd.f32 %v1599, %v1604
    %s1608 = scalar_lea.vmem %s11, 32
    %v1609 = vld [vmem:[%s1608] sm:$0xff]
    %v1610 = vld [vmem:[%s1608 + $0x8] sm:$0xff]
    %v1611 = vld [vmem:[%s1608 + $0x10] sm:$0xff]
    %v1612 = vld [vmem:[%s1608 + $0x18] sm:$0xff]
    %s1613 = scalar_lea.vmem %s12, 1
    %v1614 = vld [vmem:[%s1613] sm:$0x1]
    %v1616 = vlaneseq
    %v1617 = vshrl.u32 %v1616, 7
    %v1618 = vsub.s32 0, %v1617
    %v1619 = vrot.slane %v1614, %v1618
    %v1622 = vsel %vm198, %v1606, 0
    %v1625 = vsel %vm198, %v1607, 0
    %1627 = vmatprep.subr.mxu0 0.0
    %1628 = vmatpush1.msra.mxu0 %v1609
    %1629 = vmatprep.subr.mxu0 0.0
    %1630 = vmatpush1.msra.mxu0 %v1610
    %1631 = vmatprep.subr.mxu0 0.0
    %1632 = vmatpush1.msra.mxu0 %v1611
    %1633 = vmatprep.subr.mxu0 0.0
    %1634 = vmatpush1.msra.mxu0 %v1612
    %1635 = vmatprep.subr.mxu0 0.0
    %1636 = vmatpush1.msra.mxu0 0.0
    %1637 = vmatprep.subr.mxu0 0.0
    %1638 = vmatpush1.msra.mxu0 0.0
    %1639 = vmatprep.subr.mxu0 0.0
    %1640 = vmatpush1.msra.mxu0 0.0
    %1641 = vmatprep.subr.mxu0 0.0
    %1642 = vmatpush1.msra.mxu0 0.0
    %1643 = vmatprep.subr.mxu0 0.0
    %1644 = vmatpush1.msra.mxu0 0.0
    %1645 = vmatprep.subr.mxu0 0.0
    %1646 = vmatpush1.msra.mxu0 0.0
    %1647 = vmatprep.subr.mxu0 0.0
    %1648 = vmatpush1.msra.mxu0 0.0
    %1649 = vmatprep.subr.mxu0 0.0
    %1650 = vmatpush1.msra.mxu0 0.0
    %1651 = vmatprep.subr.mxu0 0.0
    %1652 = vmatpush1.msra.mxu0 0.0
    %1653 = vmatprep.subr.mxu0 0.0
    %1654 = vmatpush1.msra.mxu0 0.0
    %1655 = vmatprep.subr.mxu0 0.0
    %1656 = vmatpush1.msra.mxu0 0.0
    %1657 = vmatprep.subr.mxu0 0.0
    %1658 = vmatpush1.msra.mxu0 0.0
    %1659 = vmatprep.subr.mxu0 0.0
    %1660 = vmatpush1.msra.mxu0 0.0
    %1661 = vmatprep.subr.mxu0 0.0
    %1662 = vmatpush1.msra.mxu0 0.0
    %1663 = vmatprep.subr.mxu0 0.0
    %1664 = vmatpush1.msra.mxu0 0.0
    %1665 = vmatprep.subr.mxu0 0.0
    %1666 = vmatpush1.msra.mxu0 0.0
    %1667 = vmatprep.subr.mxu0 0.0
    %1668 = vmatpush1.msra.mxu0 0.0
    %1669 = vmatprep.subr.mxu0 0.0
    %1670 = vmatpush1.msra.mxu0 0.0
    %1671 = vmatprep.subr.mxu0 0.0
    %1672 = vmatpush1.msra.mxu0 0.0
    %1673 = vmatprep.subr.mxu0 0.0
    %1674 = vmatpush1.msra.mxu0 0.0
    %1675 = vmatprep.subr.mxu0 0.0
    %1676 = vmatpush1.msra.mxu0 0.0
    %1677 = vmatprep.subr.mxu0 0.0
    %1678 = vmatpush1.msra.mxu0 0.0
    %1679 = vmatprep.subr.mxu0 0.0
    %1680 = vmatpush1.msra.mxu0 0.0
    %1681 = vmatprep.subr.mxu0 0.0
    %1682 = vmatpush1.msra.mxu0 0.0
    %1683 = vmatprep.subr.mxu0 0.0
    %1684 = vmatpush1.msra.mxu0 0.0
    %1685 = vmatprep.subr.mxu0 0.0
    %1686 = vmatpush1.msra.mxu0 0.0
    %1687 = vmatprep.subr.mxu0 0.0
    %1688 = vmatpush1.msra.mxu0 0.0
    %1689 = vmatprep.subr.mxu0 0.0
    %1690 = vmatpush1.msra.mxu0 0.0
    %1691 = vmatprep.mubr.f32.mxu0 0.0
    %1692 = vmatmul.mubr.f32.gmra.mrb[0].mxu0 %v1622
    %v1693 = vpop.f32.mrb[0].mxu0
    %v1694 = vadd.f32 %v1619, %v1693
    %v1695 = vpop.f32.mrb[0].mxu0
    %1696 = vmatprep.mubr.f32.mxu0 0.0
    %1697 = vmatmul.mubr.f32.gmra.mrb[0].mxu0 %v1625
    %v1698 = vpop.f32.mrb[0].mxu0
    %v1699 = vadd.f32 %v1619, %v1698
    %v1700 = vpop.f32.mrb[0].mxu0
    %1701 = vdwg.mxu0
    %v1702 = vmax.f32 %v1694, 0.0
    %v1703 = vmax.f32 %v1699, 0.0
    %s1704 = scalar_lea.vmem %s13, 32
    %v1705 = vld [vmem:[%s1704] sm:$0xff]
    %v1706 = vld [vmem:[%s1704 + $0x8] sm:$0xff]
    %v1707 = vld [vmem:[%s1704 + $0x10] sm:$0xff]
    %v1708 = vld [vmem:[%s1704 + $0x18] sm:$0xff]
    %s1709 = scalar_lea.vmem %s14, 1
    %v1710 = vld [vmem:[%s1709] sm:$0x1]
    %v1712 = vlaneseq
    %v1713 = vshrl.u32 %v1712, 7
    %v1714 = vsub.s32 0, %v1713
    %v1715 = vrot.slane %v1710, %v1714
    %v1718 = vsel %vm198, %v1702, 0
    %v1721 = vsel %vm198, %v1703, 0
    %1723 = vmatprep.subr.mxu0 0.0
    %1724 = vmatpush1.msra.mxu0 %v1705
    %1725 = vmatprep.subr.mxu0 0.0
    %1726 = vmatpush1.msra.mxu0 %v1706
    %1727 = vmatprep.subr.mxu0 0.0
    %1728 = vmatpush1.msra.mxu0 %v1707
    %1729 = vmatprep.subr.mxu0 0.0
    %1730 = vmatpush1.msra.mxu0 %v1708
    %1731 = vmatprep.subr.mxu0 0.0
    %1732 = vmatpush1.msra.mxu0 0.0
    %1733 = vmatprep.subr.mxu0 0.0
    %1734 = vmatpush1.msra.mxu0 0.0
    %1735 = vmatprep.subr.mxu0 0.0
    %1736 = vmatpush1.msra.mxu0 0.0
    %1737 = vmatprep.subr.mxu0 0.0
    %1738 = vmatpush1.msra.mxu0 0.0
    %1739 = vmatprep.subr.mxu0 0.0
    %1740 = vmatpush1.msra.mxu0 0.0
    %1741 = vmatprep.subr.mxu0 0.0
    %1742 = vmatpush1.msra.mxu0 0.0
    %1743 = vmatprep.subr.mxu0 0.0
    %1744 = vmatpush1.msra.mxu0 0.0
    %1745 = vmatprep.subr.mxu0 0.0
    %1746 = vmatpush1.msra.mxu0 0.0
    %1747 = vmatprep.subr.mxu0 0.0
    %1748 = vmatpush1.msra.mxu0 0.0
    %1749 = vmatprep.subr.mxu0 0.0
    %1750 = vmatpush1.msra.mxu0 0.0
    %1751 = vmatprep.subr.mxu0 0.0
    %1752 = vmatpush1.msra.mxu0 0.0
    %1753 = vmatprep.subr.mxu0 0.0
    %1754 = vmatpush1.msra.mxu0 0.0
    %1755 = vmatprep.subr.mxu0 0.0
    %1756 = vmatpush1.msra.mxu0 0.0
    %1757 = vmatprep.subr.mxu0 0.0
    %1758 = vmatpush1.msra.mxu0 0.0
    %1759 = vmatprep.subr.mxu0 0.0
    %1760 = vmatpush1.msra.mxu0 0.0
    %1761 = vmatprep.subr.mxu0 0.0
    %1762 = vmatpush1.msra.mxu0 0.0
    %1763 = vmatprep.subr.mxu0 0.0
    %1764 = vmatpush1.msra.mxu0 0.0
    %1765 = vmatprep.subr.mxu0 0.0
    %1766 = vmatpush1.msra.mxu0 0.0
    %1767 = vmatprep.subr.mxu0 0.0
    %1768 = vmatpush1.msra.mxu0 0.0
    %1769 = vmatprep.subr.mxu0 0.0
    %1770 = vmatpush1.msra.mxu0 0.0
    %1771 = vmatprep.subr.mxu0 0.0
    %1772 = vmatpush1.msra.mxu0 0.0
    %1773 = vmatprep.subr.mxu0 0.0
    %1774 = vmatpush1.msra.mxu0 0.0
    %1775 = vmatprep.subr.mxu0 0.0
    %1776 = vmatpush1.msra.mxu0 0.0
    %1777 = vmatprep.subr.mxu0 0.0
    %1778 = vmatpush1.msra.mxu0 0.0
    %1779 = vmatprep.subr.mxu0 0.0
    %1780 = vmatpush1.msra.mxu0 0.0
    %1781 = vmatprep.subr.mxu0 0.0
    %1782 = vmatpush1.msra.mxu0 0.0
    %1783 = vmatprep.subr.mxu0 0.0
    %1784 = vmatpush1.msra.mxu0 0.0
    %1785 = vmatprep.subr.mxu0 0.0
    %1786 = vmatpush1.msra.mxu0 0.0
    %1787 = vmatprep.mubr.f32.mxu0 0.0
    %1788 = vmatmul.mubr.f32.gmra.mrb[0].mxu0 %v1718
    %v1789 = vpop.f32.mrb[0].mxu0
    %v1790 = vadd.f32 %v1715, %v1789
    %v1791 = vpop.f32.mrb[0].mxu0
    %1792 = vmatprep.mubr.f32.mxu0 0.0
    %1793 = vmatmul.mubr.f32.gmra.mrb[0].mxu0 %v1721
    %v1794 = vpop.f32.mrb[0].mxu0
    %v1795 = vpop.f32.mrb[0].mxu0
    %1796 = vdwg.mxu0
    %v1797 = vadd.f32 %v1606, %v1790
    %s1798 = scalar_lea.vmem %s15, 1
    %v1799 = vld [vmem:[%s1798] sm:$0x1]
    %s1800 = scalar_lea.vmem %s16, 1
    %v1801 = vld [vmem:[%s1800] sm:$0x1]
    %v1802 = vsel %vm198, %v1797, 0.0
    %1803 = vadd.xlane.f32.xlu0 %v1802
    %v1804 = vpop.xlane.xlu0 %1803
    %v1805 = vmul.f32 %v1804, %v747
    %v1806 = vsub.f32 %v1797, %v1805
    %v1807 = vmul.f32 %v1806, %v1806
    %v1808 = vsel %vm198, %v1807, 0.0
    %1809 = vadd.xlane.f32.xlu0 %v1808
    %v1810 = vpop.xlane.xlu0 %1809
    %v1811 = vmul.f32 %v1810, %v747
    %v1812 = vadd.f32 %v1811, 1e-05
    %v1813 = vrsqrt.pop %v1812
    %v1814 = vmul.f32 %v1806, %v1813
    %v1816 = vlaneseq
    %v1817 = vshrl.u32 %v1816, 7
    %v1818 = vsub.s32 0, %v1817
    %v1819 = vrot.slane %v1799, %v1818
    %v1821 = vmul.f32 %v1814, %v1819
    %v1823 = vlaneseq
    %v1824 = vshrl.u32 %v1823, 7
    %v1825 = vsub.s32 0, %v1824
    %v1826 = vrot.slane %v1801, %v1825
    %v1828 = vadd.f32 %v1821, %v1826
    %v1829 = vld [vmem:[%s17] sm:$0xff]
    %v1830 = vld [vmem:[%s17 + $0x8] sm:$0xff]
    %v1831 = vld [vmem:[%s17 + $0x10] sm:$0xff]
    %v1832 = vld [vmem:[%s17 + $0x18] sm:$0xff]
    %v1833 = vld [vmem:[%s18] sm:$0x1]
    %v1835 = vlaneseq
    %v1836 = vshrl.u32 %v1835, 7
    %v1837 = vsub.s32 0, %v1836
    %v1838 = vrot.slane %v1833, %v1837
    %v1841 = vsel %vm198, %v1828, 0
    %1843 = vmatprep.subr.mxu0 0.0
    %1844 = vmatpush1.msra.mxu0 %v1829
    %1845 = vmatprep.subr.mxu0 0.0
    %1846 = vmatpush1.msra.mxu0 %v1830
    %1847 = vmatprep.subr.mxu0 0.0
    %1848 = vmatpush1.msra.mxu0 %v1831
    %1849 = vmatprep.subr.mxu0 0.0
    %1850 = vmatpush1.msra.mxu0 %v1832
    %1851 = vmatprep.subr.mxu0 0.0
    %1852 = vmatpush1.msra.mxu0 0.0
    %1853 = vmatprep.subr.mxu0 0.0
    %1854 = vmatpush1.msra.mxu0 0.0
    %1855 = vmatprep.subr.mxu0 0.0
    %1856 = vmatpush1.msra.mxu0 0.0
    %1857 = vmatprep.subr.mxu0 0.0
    %1858 = vmatpush1.msra.mxu0 0.0
    %1859 = vmatprep.subr.mxu0 0.0
    %1860 = vmatpush1.msra.mxu0 0.0
    %1861 = vmatprep.subr.mxu0 0.0
    %1862 = vmatpush1.msra.mxu0 0.0
    %1863 = vmatprep.subr.mxu0 0.0
    %1864 = vmatpush1.msra.mxu0 0.0
    %1865 = vmatprep.subr.mxu0 0.0
    %1866 = vmatpush1.msra.mxu0 0.0
    %1867 = vmatprep.subr.mxu0 0.0
    %1868 = vmatpush1.msra.mxu0 0.0
    %1869 = vmatprep.subr.mxu0 0.0
    %1870 = vmatpush1.msra.mxu0 0.0
    %1871 = vmatprep.subr.mxu0 0.0
    %1872 = vmatpush1.msra.mxu0 0.0
    %1873 = vmatprep.subr.mxu0 0.0
    %1874 = vmatpush1.msra.mxu0 0.0
    %1875 = vmatprep.subr.mxu0 0.0
    %1876 = vmatpush1.msra.mxu0 0.0
    %1877 = vmatprep.subr.mxu0 0.0
    %1878 = vmatpush1.msra.mxu0 0.0
    %1879 = vmatprep.subr.mxu0 0.0
    %1880 = vmatpush1.msra.mxu0 0.0
    %1881 = vmatprep.subr.mxu0 0.0
    %1882 = vmatpush1.msra.mxu0 0.0
    %1883 = vmatprep.subr.mxu0 0.0
    %1884 = vmatpush1.msra.mxu0 0.0
    %1885 = vmatprep.subr.mxu0 0.0
    %1886 = vmatpush1.msra.mxu0 0.0
    %1887 = vmatprep.subr.mxu0 0.0
    %1888 = vmatpush1.msra.mxu0 0.0
    %1889 = vmatprep.subr.mxu0 0.0
    %1890 = vmatpush1.msra.mxu0 0.0
    %1891 = vmatprep.subr.mxu0 0.0
    %1892 = vmatpush1.msra.mxu0 0.0
    %1893 = vmatprep.subr.mxu0 0.0
    %1894 = vmatpush1.msra.mxu0 0.0
    %1895 = vmatprep.subr.mxu0 0.0
    %1896 = vmatpush1.msra.mxu0 0.0
    %1897 = vmatprep.subr.mxu0 0.0
    %1898 = vmatpush1.msra.mxu0 0.0
    %1899 = vmatprep.subr.mxu0 0.0
    %1900 = vmatpush1.msra.mxu0 0.0
    %1901 = vmatprep.subr.mxu0 0.0
    %1902 = vmatpush1.msra.mxu0 0.0
    %1903 = vmatprep.subr.mxu0 0.0
    %1904 = vmatpush1.msra.mxu0 0.0
    %1905 = vmatprep.subr.mxu0 0.0
    %1906 = vmatpush1.msra.mxu0 0.0
    %1907 = vmatprep.mubr.f32.mxu0 0.0
    %1908 = vmatmul.mubr.f32.gmra.mrb[0].mxu0 %v1841
    %v1909 = vpop.f32.mrb[0].mxu0
    %v1910 = vadd.f32 %v1838, %v1909
    %v1911 = vpop.f32.mrb[0].mxu0
    %1912 = vdwg.mxu0
    %1913 = vst [vmem:[#allocation2] sm:$0x3] %v1910
    // Predicated region
    $region78: #{transformer_forward.1} parent=1 // pred_check
      _
    $region79: #{transformer_forward.1} parent=1 // pred_check_branch
      %1915 = sbr.rel (0) target = $region81
    $region80: #{transformer_forward.1} parent=1 // pred_region
      %s1917 = ssub.s32 32, 32
      %1918 = vsyncadd [#allocation3], %s1917
      %s1920 = sshll.u32 [#allocation2], 4
      %s1921 = int_to_ptr.vmem [resolvable:$true] %s1920
      %1923 = dma.vmem_to_hbm [thread:$0]  %s1921, 32, %s19, [#allocation3]
    $region81: #{transformer_forward.1} parent=1 // pred_fallthru
      _
    // Predicated region
    $region82: #{transformer_forward.1} parent=1 // pred_check
      _
    $region83: #{transformer_forward.1} parent=1 // pred_check_branch
      %1925 = sbr.rel (0) target = $region85
    $region84: #{transformer_forward.1} parent=1 // pred_region
      %1926 = dma.done [#allocation3], 32
    $region85: #{transformer_forward.1} parent=1 // pred_fallthru
      _
    %1927 = vsyncpa [#allocation3], 1

</llo_original>
